<compile_context>
chip_gen: v7x
topology: tpu7x:2x2x1
jax: 0.10.0
libtpu: 0.0.40
codegen_flags: <defaults>
</compile_context>

<pallas_src>
import functools

import jax
import jax.numpy as jnp
from jax import lax
from jax.experimental import pallas as pl
from jax.experimental.pallas import tpu as pltpu


def _fused_td_disc_kernel(x_ref, w0_ref, wh_ref, wl_ref, b_ref, o_ref, *,
                          kernel_size, dilations, negative_slope,
                          conv_channels, in_channels, out_channels):
    """Whole discriminator for one batch element.

    x_ref : (C_in, T)                  f32 input signal
    w0_ref: (C, K*C_in)                f32 first-layer weights (tap-stacked)
    wh_ref: (L-2, C, K*C)              bf16 hidden-layer weights (tap-stacked)
    wl_ref: (C_out, K*C)               bf16 last-layer weights  (tap-stacked)
    b_ref : (C, L)                     f32 biases, column i = layer i
    o_ref : (C_out, T)                 output
    """
    K = kernel_size
    half = (K - 1) // 2
    T = x_ref.shape[-1]
    n_layers = len(dilations)

    def taps(x, dilation):
        """K copies of x shifted by (k - half)*dilation along time, zero padded."""
        C = x.shape[0]
        lane = lax.broadcasted_iota(jnp.int32, (C, T), 1)
        out = []
        for k in range(K):
            offset = (k - half) * dilation          # y[t] uses x[t + offset]
            if offset == 0:
                out.append(x)
            elif abs(offset) >= T:                  # tap falls entirely outside
                out.append(jnp.zeros_like(x))
            else:
                rolled = pltpu.roll(x, shift=(-offset) % T, axis=1)   # XLU rotate
                valid = (lane + offset >= 0) & (lane + offset < T)
                out.append(jnp.where(valid, rolled, jnp.zeros_like(rolled)))
        return out

    def mxu_conv(h, w_bf16, dilation):
        # Stack K taps on sublanes -> single deep-contraction bf16 MXU matmul.
        stacked = jnp.concatenate(taps(h, dilation), axis=0)          # (K*C_in, T)
        return jnp.dot(w_bf16, stacked.astype(jnp.bfloat16),
                       preferred_element_type=jnp.float32)

    def lrelu(a):
        return jnp.where(a >= 0, a, negative_slope * a)

    # ---- layer 0: in_channels -> conv_channels --------------------------------
    x0 = x_ref[...].astype(jnp.float32)                               # (C_in, T)
    if in_channels == 1:
        # rank-1 taps: broadcast MACs on the VPU (MXU would be <1% utilized).
        shifted = taps(x0, dilations[0])
        acc = jnp.zeros((conv_channels, T), jnp.float32)
        for k in range(K):
            acc = acc + w0_ref[:, k:k + 1] * shifted[k]               # (C,1)*(1,T)
    else:
        acc = mxu_conv(x0, w0_ref[...].astype(jnp.bfloat16), dilations[0])
    h = lrelu(acc + b_ref[:, 0:1])

    # ---- hidden layers 1 .. L-2: conv_channels -> conv_channels ---------------
    for i in range(1, n_layers - 1):
        acc = mxu_conv(h, wh_ref[i - 1], dilations[i])
        h = lrelu(acc + b_ref[:, i:i + 1])

    # ---- last layer: conv_channels -> out_channels, no activation -------------
    acc = mxu_conv(h, wl_ref[...], dilations[-1])
    acc = acc + b_ref[0:out_channels, n_layers - 1:n_layers]
    o_ref[...] = acc.astype(o_ref.dtype)


def td_discriminator_forward(x, params, negative_slope=0.2):
    """x: (B, in_channels, T) -> (B, out_channels, T). params: [(w, b, dilation)]."""
    B, in_channels, T = x.shape
    n_layers = len(params)
    assert n_layers >= 3, "fused kernel expects >= 3 conv layers"
    conv_channels, _, K = params[0][0].shape
    out_channels = params[-1][0].shape[0]
    dilations = tuple(int(d) for (_, _, d) in params)

    def stack_w(w):
        # (C_out, C_in, K) -> (C_out, K*C_in): matches the sublane-stacked taps.
        co, ci, k = w.shape
        return jnp.transpose(w, (0, 2, 1)).reshape(co, k * ci)

    w0 = stack_w(params[0][0]).astype(jnp.float32)                    # (C, K*C_in)
    wh = jnp.stack([stack_w(params[i][0])
                    for i in range(1, n_layers - 1)]).astype(jnp.bfloat16)
    wl = stack_w(params[-1][0]).astype(jnp.bfloat16)                  # (C_out, K*C)

    b_all = jnp.zeros((conv_channels, n_layers), jnp.float32)
    for i, (_, b, _) in enumerate(params):
        b_all = b_all.at[:b.shape[0], i].set(b.astype(jnp.float32))

    kernel = functools.partial(
        _fused_td_disc_kernel,
        kernel_size=int(K),
        dilations=dilations,
        negative_slope=float(negative_slope),
        conv_channels=int(conv_channels),
        in_channels=int(in_channels),
        out_channels=int(out_channels),
    )

    # TODO(synk): for production-length T, tile the time axis (with per-layer
    # dilation halos) and add a parallel T-tile grid axis so v7x's 2 TCs / 64 MiB
    # VMEM are used; at small T the whole activation fits comfortably in VMEM.
    return pl.pallas_call(
        kernel,
        out_shape=jax.ShapeDtypeStruct((B, out_channels, T), x.dtype),
        grid=(B,),
        in_specs=[
            pl.BlockSpec((pl.Squeezed(), in_channels, T), lambda b: (b, 0, 0)),
            pl.BlockSpec(w0.shape, lambda b: (0, 0)),
            pl.BlockSpec(wh.shape, lambda b: (0, 0, 0)),
            pl.BlockSpec(wl.shape, lambda b: (0, 0)),
            pl.BlockSpec(b_all.shape, lambda b: (0, 0)),
        ],
        out_specs=pl.BlockSpec((pl.Squeezed(), out_channels, T),
                               lambda b: (b, 0, 0)),
        compiler_params=pltpu.CompilerParams(dimension_semantics=("parallel",)),
    )(x, w0, wh, wl, b_all)


def init_params(key, in_channels=1, out_channels=1, kernel_size=3, layers=10,
                conv_channels=64, dilation_factor=2):
    """Deterministic parameter init mirroring the module's layer structure.

    Returns a list of (weight (C_out, C_in, K), bias (C_out,), dilation).
    """
    assert (kernel_size - 1) % 2 == 0
    assert dilation_factor > 0
    params = []
    conv_in_channels = in_channels
    for i in range(layers - 1):
        if i == 0:
            dilation = 1
        else:
            dilation = i if dilation_factor == 1 else dilation_factor ** i
            conv_in_channels = conv_channels
        key, kw, kb = jax.random.split(key, 3)
        fan_in = conv_in_channels * kernel_size
        w = jax.random.normal(kw, (conv_channels, conv_in_channels, kernel_size),
                              jnp.float32) / jnp.sqrt(fan_in)
        b = 0.01 * jax.random.normal(kb, (conv_channels,), jnp.float32)
        params.append((w, b, dilation))
    # last conv layer (dilation 1, padding (K-1)//2)
    key, kw, kb = jax.random.split(key, 3)
    fan_in = conv_in_channels * kernel_size
    w = jax.random.normal(kw, (out_channels, conv_in_channels, kernel_size),
                          jnp.float32) / jnp.sqrt(fan_in)
    b = 0.01 * jax.random.normal(kb, (out_channels,), jnp.float32)
    params.append((w, b, 1))
    return params


def td_discriminator_reference(x, params, negative_slope=0.2):
    """Pure-JAX f32 reference (lax.conv_general_dilated) for validation."""
    n = len(params)
    for i, (w, b, dilation) in enumerate(params):
        K = w.shape[-1]
        pad = (K - 1) // 2 * dilation
        y = lax.conv_general_dilated(
            x, w, window_strides=(1,), padding=[(pad, pad)],
            rhs_dilation=(dilation,),
            dimension_numbers=("NCH", "OIH", "NCH"))
        y = y + b.reshape(1, -1, 1)
        if i < n - 1:
            y = jnp.where(y >= 0, y, negative_slope * y)
        x = y
    return x


if __name__ == "__main__":
    key = jax.random.PRNGKey(0)
    key, kx = jax.random.split(key)

    # Small shapes consistent with the module's forward: input (B, in_channels, T)
    B, T = 2, 256
    in_channels, out_channels = 1, 1
    kernel_size, layers, conv_channels, dilation_factor = 3, 5, 32, 2

    params = init_params(key, in_channels, out_channels, kernel_size,
                         layers, conv_channels, dilation_factor)
    x = jax.random.normal(kx, (B, in_channels, T), jnp.float32)

    y = td_discriminator_forward(x, params)
    y = jax.block_until_ready(y)
    assert y.shape == (B, out_channels, T), y.shape

    y_ref = td_discriminator_reference(x, params)
    # bf16 MXU inputs with f32 accumulation -> tolerance appropriate for bf16.
    err = float(jnp.max(jnp.abs(y - y_ref)))
    tol = 5e-2 * max(1.0, float(jnp.max(jnp.abs(y_ref))))
    assert err <= tol, (err, tol)

    print("KERNEL_OK")
</pallas_src>

<mosaic_0001>
module attributes {stable_mosaic.version = 11 : i64} {
  func.func @_fused_td_disc_kernel(%arg0: i32, %arg1: memref<1x1x256xf32, #tpu.memory_space<vmem>>, %arg2: memref<32x3xf32, #tpu.memory_space<vmem>>, %arg3: memref<3x32x96xbf16, #tpu.memory_space<vmem>>, %arg4: memref<1x96xbf16, #tpu.memory_space<vmem>>, %arg5: memref<32x5xf32, #tpu.memory_space<vmem>>, %arg6: memref<1x1x256xf32, #tpu.memory_space<vmem>>) attributes {dimension_semantics = [#tpu.dimension_semantics<parallel>], iteration_bounds = array<i64: 2>, scalar_prefetch = 0 : i64, scratch_operands = 0 : i64, tpu.core_type = #tpu.core_type<tc>, window_params = [{transform_indices = @transform_0, window_bounds = array<i64: 1, 1, 256>}, {pipeline_mode = #tpu.pipeline_mode<synchronous>, transform_indices = @transform_1, window_bounds = array<i64: 32, 3>}, {pipeline_mode = #tpu.pipeline_mode<synchronous>, transform_indices = @transform_2, window_bounds = array<i64: 3, 32, 96>}, {pipeline_mode = #tpu.pipeline_mode<synchronous>, transform_indices = @transform_3, window_bounds = array<i64: 1, 96>}, {pipeline_mode = #tpu.pipeline_mode<synchronous>, transform_indices = @transform_4, window_bounds = array<i64: 32, 5>}, {transform_indices = @transform_5, window_bounds = array<i64: 1, 1, 256>}]} {
    %c0 = arith.constant 0 : index
    %c0_0 = arith.constant 0 : index
    %c0_1 = arith.constant 0 : index
    %0 = vector.load %arg1[%c0, %c0_0, %c0_1] : memref<1x1x256xf32, #tpu.memory_space<vmem>>, vector<1x1x256xf32>
    %1 = vector.shape_cast %0 : vector<1x1x256xf32> to vector<1x256xf32>
    %2 = tpu.iota {dimensions = array<i32: 1>} : vector<1x256xi32>
    %c1_i32 = arith.constant 1 : i32
    %3 = tpu.dynamic_rotate %1 by %c1_i32 dim 1 : vector<1x256xf32>, i32 -> vector<1x256xf32>
    %c-1_i32 = arith.constant -1 : i32
    %4 = vector.broadcast %c-1_i32 : i32 to vector<1x256xi32>
    %5 = arith.addi %2, %4 : vector<1x256xi32>
    %c0_i32 = arith.constant 0 : i32
    %6 = vector.broadcast %c0_i32 : i32 to vector<1x256xi32>
    %7 = arith.cmpi sge, %5, %6 : vector<1x256xi32>
    %c-1_i32_2 = arith.constant -1 : i32
    %8 = vector.broadcast %c-1_i32_2 : i32 to vector<1x256xi32>
    %9 = arith.addi %2, %8 : vector<1x256xi32>
    %c256_i32 = arith.constant 256 : i32
    %10 = vector.broadcast %c256_i32 : i32 to vector<1x256xi32>
    %11 = arith.cmpi slt, %9, %10 : vector<1x256xi32>
    %12 = arith.andi %7, %11 : vector<1x256xi1>
    %cst = arith.constant 0.000000e+00 : f32
    %13 = vector.broadcast %cst : f32 to vector<1x256xf32>
    %14 = arith.select %12, %3, %13 : vector<1x256xi1>, vector<1x256xf32>
    %c255_i32 = arith.constant 255 : i32
    %15 = tpu.dynamic_rotate %1 by %c255_i32 dim 1 : vector<1x256xf32>, i32 -> vector<1x256xf32>
    %c1_i32_3 = arith.constant 1 : i32
    %16 = vector.broadcast %c1_i32_3 : i32 to vector<1x256xi32>
    %17 = arith.addi %2, %16 : vector<1x256xi32>
    %c0_i32_4 = arith.constant 0 : i32
    %18 = vector.broadcast %c0_i32_4 : i32 to vector<1x256xi32>
    %19 = arith.cmpi sge, %17, %18 : vector<1x256xi32>
    %c1_i32_5 = arith.constant 1 : i32
    %20 = vector.broadcast %c1_i32_5 : i32 to vector<1x256xi32>
    %21 = arith.addi %2, %20 : vector<1x256xi32>
    %c256_i32_6 = arith.constant 256 : i32
    %22 = vector.broadcast %c256_i32_6 : i32 to vector<1x256xi32>
    %23 = arith.cmpi slt, %21, %22 : vector<1x256xi32>
    %24 = arith.andi %19, %23 : vector<1x256xi1>
    %cst_7 = arith.constant 0.000000e+00 : f32
    %25 = vector.broadcast %cst_7 : f32 to vector<1x256xf32>
    %26 = arith.select %24, %15, %25 : vector<1x256xi1>, vector<1x256xf32>
    %cst_8 = arith.constant 0.000000e+00 : f32
    %27 = vector.broadcast %cst_8 : f32 to vector<32x256xf32>
    %c0_9 = arith.constant 0 : index
    %c0_10 = arith.constant 0 : index
    %28 = vector.load %arg2[%c0_9, %c0_10] : memref<32x3xf32, #tpu.memory_space<vmem>>, vector<32x1xf32>
    %29 = vector.broadcast %28 : vector<32x1xf32> to vector<32x256xf32>
    %30 = vector.broadcast %14 : vector<1x256xf32> to vector<32x256xf32>
    %31 = arith.mulf %29, %30 : vector<32x256xf32>
    %32 = arith.addf %27, %31 : vector<32x256xf32>
    %c0_11 = arith.constant 0 : index
    %c1 = arith.constant 1 : index
    %33 = vector.load %arg2[%c0_11, %c1] : memref<32x3xf32, #tpu.memory_space<vmem>>, vector<32x1xf32>
    %34 = vector.broadcast %33 : vector<32x1xf32> to vector<32x256xf32>
    %35 = vector.broadcast %1 : vector<1x256xf32> to vector<32x256xf32>
    %36 = arith.mulf %34, %35 : vector<32x256xf32>
    %37 = arith.addf %32, %36 : vector<32x256xf32>
    %c0_12 = arith.constant 0 : index
    %c2 = arith.constant 2 : index
    %38 = vector.load %arg2[%c0_12, %c2] : memref<32x3xf32, #tpu.memory_space<vmem>>, vector<32x1xf32>
    %39 = vector.broadcast %38 : vector<32x1xf32> to vector<32x256xf32>
    %40 = vector.broadcast %26 : vector<1x256xf32> to vector<32x256xf32>
    %41 = arith.mulf %39, %40 : vector<32x256xf32>
    %42 = arith.addf %37, %41 : vector<32x256xf32>
    %c0_13 = arith.constant 0 : index
    %c0_14 = arith.constant 0 : index
    %43 = vector.load %arg5[%c0_13, %c0_14] : memref<32x5xf32, #tpu.memory_space<vmem>>, vector<32x1xf32>
    %44 = vector.broadcast %43 : vector<32x1xf32> to vector<32x256xf32>
    %45 = arith.addf %42, %44 : vector<32x256xf32>
    %cst_15 = arith.constant 0.000000e+00 : f32
    %46 = vector.broadcast %cst_15 : f32 to vector<32x256xf32>
    %47 = arith.cmpf oge, %45, %46 : vector<32x256xf32>
    %cst_16 = arith.constant 2.000000e-01 : f32
    %48 = vector.broadcast %cst_16 : f32 to vector<32x256xf32>
    %49 = arith.mulf %48, %45 : vector<32x256xf32>
    %50 = arith.select %47, %45, %49 : vector<32x256xi1>, vector<32x256xf32>
    %c0_17 = arith.constant 0 : index
    %c0_18 = arith.constant 0 : index
    %c0_19 = arith.constant 0 : index
    %51 = vector.load %arg3[%c0_17, %c0_18, %c0_19] : memref<3x32x96xbf16, #tpu.memory_space<vmem>>, vector<1x32x96xbf16>
    %52 = vector.shape_cast %51 : vector<1x32x96xbf16> to vector<32x96xbf16>
    %53 = tpu.iota {dimensions = array<i32: 1>} : vector<32x256xi32>
    %c2_i32 = arith.constant 2 : i32
    %54 = tpu.dynamic_rotate %50 by %c2_i32 dim 1 : vector<32x256xf32>, i32 -> vector<32x256xf32>
    %c-2_i32 = arith.constant -2 : i32
    %55 = vector.broadcast %c-2_i32 : i32 to vector<32x256xi32>
    %56 = arith.addi %53, %55 : vector<32x256xi32>
    %c0_i32_20 = arith.constant 0 : i32
    %57 = vector.broadcast %c0_i32_20 : i32 to vector<32x256xi32>
    %58 = arith.cmpi sge, %56, %57 : vector<32x256xi32>
    %c-2_i32_21 = arith.constant -2 : i32
    %59 = vector.broadcast %c-2_i32_21 : i32 to vector<32x256xi32>
    %60 = arith.addi %53, %59 : vector<32x256xi32>
    %c256_i32_22 = arith.constant 256 : i32
    %61 = vector.broadcast %c256_i32_22 : i32 to vector<32x256xi32>
    %62 = arith.cmpi slt, %60, %61 : vector<32x256xi32>
    %63 = arith.andi %58, %62 : vector<32x256xi1>
    %cst_23 = arith.constant 0.000000e+00 : f32
    %64 = vector.broadcast %cst_23 : f32 to vector<32x256xf32>
    %65 = arith.select %63, %54, %64 : vector<32x256xi1>, vector<32x256xf32>
    %c254_i32 = arith.constant 254 : i32
    %66 = tpu.dynamic_rotate %50 by %c254_i32 dim 1 : vector<32x256xf32>, i32 -> vector<32x256xf32>
    %c2_i32_24 = arith.constant 2 : i32
    %67 = vector.broadcast %c2_i32_24 : i32 to vector<32x256xi32>
    %68 = arith.addi %53, %67 : vector<32x256xi32>
    %c0_i32_25 = arith.constant 0 : i32
    %69 = vector.broadcast %c0_i32_25 : i32 to vector<32x256xi32>
    %70 = arith.cmpi sge, %68, %69 : vector<32x256xi32>
    %c2_i32_26 = arith.constant 2 : i32
    %71 = vector.broadcast %c2_i32_26 : i32 to vector<32x256xi32>
    %72 = arith.addi %53, %71 : vector<32x256xi32>
    %c256_i32_27 = arith.constant 256 : i32
    %73 = vector.broadcast %c256_i32_27 : i32 to vector<32x256xi32>
    %74 = arith.cmpi slt, %72, %73 : vector<32x256xi32>
    %75 = arith.andi %70, %74 : vector<32x256xi1>
    %cst_28 = arith.constant 0.000000e+00 : f32
    %76 = vector.broadcast %cst_28 : f32 to vector<32x256xf32>
    %77 = arith.select %75, %66, %76 : vector<32x256xi1>, vector<32x256xf32>
    %78 = tpu.concatenate %65, %50, %77 in 0 : vector<32x256xf32>, vector<32x256xf32>, vector<32x256xf32> -> vector<96x256xf32>
    %79 = arith.truncf %78 : vector<96x256xf32> to vector<96x256xbf16>
    %cst_29 = arith.constant dense<0.000000e+00> : vector<32x256xf32>
    %80 = tpu.matmul %52, %79, %cst_29 {dimension_numbers = #tpu.dot_dimension_numbers<[1], [0], [0], [1], [0, 0, 1, 1], [], []>} : vector<32x96xbf16>, vector<96x256xbf16>, vector<32x256xf32> -> vector<32x256xf32>
    %c0_30 = arith.constant 0 : index
    %c1_31 = arith.constant 1 : index
    %81 = vector.load %arg5[%c0_30, %c1_31] : memref<32x5xf32, #tpu.memory_space<vmem>>, vector<32x1xf32>
    %82 = vector.broadcast %81 : vector<32x1xf32> to vector<32x256xf32>
    %83 = arith.addf %80, %82 : vector<32x256xf32>
    %cst_32 = arith.constant 0.000000e+00 : f32
    %84 = vector.broadcast %cst_32 : f32 to vector<32x256xf32>
    %85 = arith.cmpf oge, %83, %84 : vector<32x256xf32>
    %cst_33 = arith.constant 2.000000e-01 : f32
    %86 = vector.broadcast %cst_33 : f32 to vector<32x256xf32>
    %87 = arith.mulf %86, %83 : vector<32x256xf32>
    %88 = arith.select %85, %83, %87 : vector<32x256xi1>, vector<32x256xf32>
    %c1_34 = arith.constant 1 : index
    %c0_35 = arith.constant 0 : index
    %c0_36 = arith.constant 0 : index
    %89 = vector.load %arg3[%c1_34, %c0_35, %c0_36] : memref<3x32x96xbf16, #tpu.memory_space<vmem>>, vector<1x32x96xbf16>
    %90 = vector.shape_cast %89 : vector<1x32x96xbf16> to vector<32x96xbf16>
    %91 = tpu.iota {dimensions = array<i32: 1>} : vector<32x256xi32>
    %c4_i32 = arith.constant 4 : i32
    %92 = tpu.dynamic_rotate %88 by %c4_i32 dim 1 : vector<32x256xf32>, i32 -> vector<32x256xf32>
    %c-4_i32 = arith.constant -4 : i32
    %93 = vector.broadcast %c-4_i32 : i32 to vector<32x256xi32>
    %94 = arith.addi %91, %93 : vector<32x256xi32>
    %c0_i32_37 = arith.constant 0 : i32
    %95 = vector.broadcast %c0_i32_37 : i32 to vector<32x256xi32>
    %96 = arith.cmpi sge, %94, %95 : vector<32x256xi32>
    %c-4_i32_38 = arith.constant -4 : i32
    %97 = vector.broadcast %c-4_i32_38 : i32 to vector<32x256xi32>
    %98 = arith.addi %91, %97 : vector<32x256xi32>
    %c256_i32_39 = arith.constant 256 : i32
    %99 = vector.broadcast %c256_i32_39 : i32 to vector<32x256xi32>
    %100 = arith.cmpi slt, %98, %99 : vector<32x256xi32>
    %101 = arith.andi %96, %100 : vector<32x256xi1>
    %cst_40 = arith.constant 0.000000e+00 : f32
    %102 = vector.broadcast %cst_40 : f32 to vector<32x256xf32>
    %103 = arith.select %101, %92, %102 : vector<32x256xi1>, vector<32x256xf32>
    %c252_i32 = arith.constant 252 : i32
    %104 = tpu.dynamic_rotate %88 by %c252_i32 dim 1 : vector<32x256xf32>, i32 -> vector<32x256xf32>
    %c4_i32_41 = arith.constant 4 : i32
    %105 = vector.broadcast %c4_i32_41 : i32 to vector<32x256xi32>
    %106 = arith.addi %91, %105 : vector<32x256xi32>
    %c0_i32_42 = arith.constant 0 : i32
    %107 = vector.broadcast %c0_i32_42 : i32 to vector<32x256xi32>
    %108 = arith.cmpi sge, %106, %107 : vector<32x256xi32>
    %c4_i32_43 = arith.constant 4 : i32
    %109 = vector.broadcast %c4_i32_43 : i32 to vector<32x256xi32>
    %110 = arith.addi %91, %109 : vector<32x256xi32>
    %c256_i32_44 = arith.constant 256 : i32
    %111 = vector.broadcast %c256_i32_44 : i32 to vector<32x256xi32>
    %112 = arith.cmpi slt, %110, %111 : vector<32x256xi32>
    %113 = arith.andi %108, %112 : vector<32x256xi1>
    %cst_45 = arith.constant 0.000000e+00 : f32
    %114 = vector.broadcast %cst_45 : f32 to vector<32x256xf32>
    %115 = arith.select %113, %104, %114 : vector<32x256xi1>, vector<32x256xf32>
    %116 = tpu.concatenate %103, %88, %115 in 0 : vector<32x256xf32>, vector<32x256xf32>, vector<32x256xf32> -> vector<96x256xf32>
    %117 = arith.truncf %116 : vector<96x256xf32> to vector<96x256xbf16>
    %cst_46 = arith.constant dense<0.000000e+00> : vector<32x256xf32>
    %118 = tpu.matmul %90, %117, %cst_46 {dimension_numbers = #tpu.dot_dimension_numbers<[1], [0], [0], [1], [0, 0, 1, 1], [], []>} : vector<32x96xbf16>, vector<96x256xbf16>, vector<32x256xf32> -> vector<32x256xf32>
    %c0_47 = arith.constant 0 : index
    %c2_48 = arith.constant 2 : index
    %119 = vector.load %arg5[%c0_47, %c2_48] : memref<32x5xf32, #tpu.memory_space<vmem>>, vector<32x1xf32>
    %120 = vector.broadcast %119 : vector<32x1xf32> to vector<32x256xf32>
    %121 = arith.addf %118, %120 : vector<32x256xf32>
    %cst_49 = arith.constant 0.000000e+00 : f32
    %122 = vector.broadcast %cst_49 : f32 to vector<32x256xf32>
    %123 = arith.cmpf oge, %121, %122 : vector<32x256xf32>
    %cst_50 = arith.constant 2.000000e-01 : f32
    %124 = vector.broadcast %cst_50 : f32 to vector<32x256xf32>
    %125 = arith.mulf %124, %121 : vector<32x256xf32>
    %126 = arith.select %123, %121, %125 : vector<32x256xi1>, vector<32x256xf32>
    %c2_51 = arith.constant 2 : index
    %c0_52 = arith.constant 0 : index
    %c0_53 = arith.constant 0 : index
    %127 = vector.load %arg3[%c2_51, %c0_52, %c0_53] : memref<3x32x96xbf16, #tpu.memory_space<vmem>>, vector<1x32x96xbf16>
    %128 = vector.shape_cast %127 : vector<1x32x96xbf16> to vector<32x96xbf16>
    %129 = tpu.iota {dimensions = array<i32: 1>} : vector<32x256xi32>
    %c8_i32 = arith.constant 8 : i32
    %130 = tpu.dynamic_rotate %126 by %c8_i32 dim 1 : vector<32x256xf32>, i32 -> vector<32x256xf32>
    %c-8_i32 = arith.constant -8 : i32
    %131 = vector.broadcast %c-8_i32 : i32 to vector<32x256xi32>
    %132 = arith.addi %129, %131 : vector<32x256xi32>
    %c0_i32_54 = arith.constant 0 : i32
    %133 = vector.broadcast %c0_i32_54 : i32 to vector<32x256xi32>
    %134 = arith.cmpi sge, %132, %133 : vector<32x256xi32>
    %c-8_i32_55 = arith.constant -8 : i32
    %135 = vector.broadcast %c-8_i32_55 : i32 to vector<32x256xi32>
    %136 = arith.addi %129, %135 : vector<32x256xi32>
    %c256_i32_56 = arith.constant 256 : i32
    %137 = vector.broadcast %c256_i32_56 : i32 to vector<32x256xi32>
    %138 = arith.cmpi slt, %136, %137 : vector<32x256xi32>
    %139 = arith.andi %134, %138 : vector<32x256xi1>
    %cst_57 = arith.constant 0.000000e+00 : f32
    %140 = vector.broadcast %cst_57 : f32 to vector<32x256xf32>
    %141 = arith.select %139, %130, %140 : vector<32x256xi1>, vector<32x256xf32>
    %c248_i32 = arith.constant 248 : i32
    %142 = tpu.dynamic_rotate %126 by %c248_i32 dim 1 : vector<32x256xf32>, i32 -> vector<32x256xf32>
    %c8_i32_58 = arith.constant 8 : i32
    %143 = vector.broadcast %c8_i32_58 : i32 to vector<32x256xi32>
    %144 = arith.addi %129, %143 : vector<32x256xi32>
    %c0_i32_59 = arith.constant 0 : i32
    %145 = vector.broadcast %c0_i32_59 : i32 to vector<32x256xi32>
    %146 = arith.cmpi sge, %144, %145 : vector<32x256xi32>
    %c8_i32_60 = arith.constant 8 : i32
    %147 = vector.broadcast %c8_i32_60 : i32 to vector<32x256xi32>
    %148 = arith.addi %129, %147 : vector<32x256xi32>
    %c256_i32_61 = arith.constant 256 : i32
    %149 = vector.broadcast %c256_i32_61 : i32 to vector<32x256xi32>
    %150 = arith.cmpi slt, %148, %149 : vector<32x256xi32>
    %151 = arith.andi %146, %150 : vector<32x256xi1>
    %cst_62 = arith.constant 0.000000e+00 : f32
    %152 = vector.broadcast %cst_62 : f32 to vector<32x256xf32>
    %153 = arith.select %151, %142, %152 : vector<32x256xi1>, vector<32x256xf32>
    %154 = tpu.concatenate %141, %126, %153 in 0 : vector<32x256xf32>, vector<32x256xf32>, vector<32x256xf32> -> vector<96x256xf32>
    %155 = arith.truncf %154 : vector<96x256xf32> to vector<96x256xbf16>
    %cst_63 = arith.constant dense<0.000000e+00> : vector<32x256xf32>
    %156 = tpu.matmul %128, %155, %cst_63 {dimension_numbers = #tpu.dot_dimension_numbers<[1], [0], [0], [1], [0, 0, 1, 1], [], []>} : vector<32x96xbf16>, vector<96x256xbf16>, vector<32x256xf32> -> vector<32x256xf32>
    %c0_64 = arith.constant 0 : index
    %c3 = arith.constant 3 : index
    %157 = vector.load %arg5[%c0_64, %c3] : memref<32x5xf32, #tpu.memory_space<vmem>>, vector<32x1xf32>
    %158 = vector.broadcast %157 : vector<32x1xf32> to vector<32x256xf32>
    %159 = arith.addf %156, %158 : vector<32x256xf32>
    %cst_65 = arith.constant 0.000000e+00 : f32
    %160 = vector.broadcast %cst_65 : f32 to vector<32x256xf32>
    %161 = arith.cmpf oge, %159, %160 : vector<32x256xf32>
    %cst_66 = arith.constant 2.000000e-01 : f32
    %162 = vector.broadcast %cst_66 : f32 to vector<32x256xf32>
    %163 = arith.mulf %162, %159 : vector<32x256xf32>
    %164 = arith.select %161, %159, %163 : vector<32x256xi1>, vector<32x256xf32>
    %c0_67 = arith.constant 0 : index
    %c0_68 = arith.constant 0 : index
    %165 = vector.load %arg4[%c0_67, %c0_68] : memref<1x96xbf16, #tpu.memory_space<vmem>>, vector<1x96xbf16>
    %166 = tpu.iota {dimensions = array<i32: 1>} : vector<32x256xi32>
    %c1_i32_69 = arith.constant 1 : i32
    %167 = tpu.dynamic_rotate %164 by %c1_i32_69 dim 1 : vector<32x256xf32>, i32 -> vector<32x256xf32>
    %c-1_i32_70 = arith.constant -1 : i32
    %168 = vector.broadcast %c-1_i32_70 : i32 to vector<32x256xi32>
    %169 = arith.addi %166, %168 : vector<32x256xi32>
    %c0_i32_71 = arith.constant 0 : i32
    %170 = vector.broadcast %c0_i32_71 : i32 to vector<32x256xi32>
    %171 = arith.cmpi sge, %169, %170 : vector<32x256xi32>
    %c-1_i32_72 = arith.constant -1 : i32
    %172 = vector.broadcast %c-1_i32_72 : i32 to vector<32x256xi32>
    %173 = arith.addi %166, %172 : vector<32x256xi32>
    %c256_i32_73 = arith.constant 256 : i32
    %174 = vector.broadcast %c256_i32_73 : i32 to vector<32x256xi32>
    %175 = arith.cmpi slt, %173, %174 : vector<32x256xi32>
    %176 = arith.andi %171, %175 : vector<32x256xi1>
    %cst_74 = arith.constant 0.000000e+00 : f32
    %177 = vector.broadcast %cst_74 : f32 to vector<32x256xf32>
    %178 = arith.select %176, %167, %177 : vector<32x256xi1>, vector<32x256xf32>
    %c255_i32_75 = arith.constant 255 : i32
    %179 = tpu.dynamic_rotate %164 by %c255_i32_75 dim 1 : vector<32x256xf32>, i32 -> vector<32x256xf32>
    %c1_i32_76 = arith.constant 1 : i32
    %180 = vector.broadcast %c1_i32_76 : i32 to vector<32x256xi32>
    %181 = arith.addi %166, %180 : vector<32x256xi32>
    %c0_i32_77 = arith.constant 0 : i32
    %182 = vector.broadcast %c0_i32_77 : i32 to vector<32x256xi32>
    %183 = arith.cmpi sge, %181, %182 : vector<32x256xi32>
    %c1_i32_78 = arith.constant 1 : i32
    %184 = vector.broadcast %c1_i32_78 : i32 to vector<32x256xi32>
    %185 = arith.addi %166, %184 : vector<32x256xi32>
    %c256_i32_79 = arith.constant 256 : i32
    %186 = vector.broadcast %c256_i32_79 : i32 to vector<32x256xi32>
    %187 = arith.cmpi slt, %185, %186 : vector<32x256xi32>
    %188 = arith.andi %183, %187 : vector<32x256xi1>
    %cst_80 = arith.constant 0.000000e+00 : f32
    %189 = vector.broadcast %cst_80 : f32 to vector<32x256xf32>
    %190 = arith.select %188, %179, %189 : vector<32x256xi1>, vector<32x256xf32>
    %191 = tpu.concatenate %178, %164, %190 in 0 : vector<32x256xf32>, vector<32x256xf32>, vector<32x256xf32> -> vector<96x256xf32>
    %192 = arith.truncf %191 : vector<96x256xf32> to vector<96x256xbf16>
    %cst_81 = arith.constant dense<0.000000e+00> : vector<1x256xf32>
    %193 = tpu.matmul %165, %192, %cst_81 {dimension_numbers = #tpu.dot_dimension_numbers<[1], [0], [0], [1], [0, 0, 1, 1], [], []>} : vector<1x96xbf16>, vector<96x256xbf16>, vector<1x256xf32> -> vector<1x256xf32>
    %c0_82 = arith.constant 0 : index
    %c4 = arith.constant 4 : index
    %194 = vector.load %arg5[%c0_82, %c4] : memref<32x5xf32, #tpu.memory_space<vmem>>, vector<1x1xf32>
    %195 = vector.broadcast %194 : vector<1x1xf32> to vector<1x256xf32>
    %196 = arith.addf %193, %195 : vector<1x256xf32>
    %c0_83 = arith.constant 0 : index
    %c0_84 = arith.constant 0 : index
    %c0_85 = arith.constant 0 : index
    %197 = vector.load %arg6[%c0_83, %c0_84, %c0_85] : memref<1x1x256xf32, #tpu.memory_space<vmem>>, vector<1x1x256xf32>
    %198 = vector.shape_cast %197 : vector<1x1x256xf32> to vector<1x256xf32>
    %199 = vector.shape_cast %196 : vector<1x256xf32> to vector<1x1x256xf32>
    tpu.vector_store %arg6[%c0_83, %c0_84, %c0_85], %199 {strides = array<i32>} : memref<1x1x256xf32, #tpu.memory_space<vmem>>, vector<1x1x256xf32>,
    return
  }
  func.func @transform_0(%arg0: i32) -> (i32, i32, i32) {
    %c0_i32 = arith.constant 0 : i32
    %c0_i32_0 = arith.constant 0 : i32
    %c0_i32_1 = arith.constant 0 : i32
    return %arg0, %c0_i32, %c0_i32_0 : i32, i32, i32
  }
  func.func @transform_1(%arg0: i32) -> (i32, i32) {
    %c0_i32 = arith.constant 0 : i32
    %c0_i32_0 = arith.constant 0 : i32
    %c0_i32_1 = arith.constant 0 : i32
    return %c0_i32, %c0_i32_0 : i32, i32
  }
  func.func @transform_2(%arg0: i32) -> (i32, i32, i32) {
    %c0_i32 = arith.constant 0 : i32
    %c0_i32_0 = arith.constant 0 : i32
    %c0_i32_1 = arith.constant 0 : i32
    %c0_i32_2 = arith.constant 0 : i32
    return %c0_i32, %c0_i32_0, %c0_i32_1 : i32, i32, i32
  }
  func.func @transform_3(%arg0: i32) -> (i32, i32) {
    %c0_i32 = arith.constant 0 : i32
    %c0_i32_0 = arith.constant 0 : i32
    %c0_i32_1 = arith.constant 0 : i32
    return %c0_i32, %c0_i32_0 : i32, i32
  }
  func.func @transform_4(%arg0: i32) -> (i32, i32) {
    %c0_i32 = arith.constant 0 : i32
    %c0_i32_0 = arith.constant 0 : i32
    %c0_i32_1 = arith.constant 0 : i32
    return %c0_i32, %c0_i32_0 : i32, i32
  }
  func.func @transform_5(%arg0: i32) -> (i32, i32, i32) {
    %c0_i32 = arith.constant 0 : i32
    %c0_i32_0 = arith.constant 0 : i32
    %c0_i32_1 = arith.constant 0 : i32
    return %arg0, %c0_i32, %c0_i32_0 : i32, i32, i32
  }
}

</mosaic_0001>

<llo_original>
// kernel: tpu_custom_call.1
$region0: #{tpu_custom_call.1}
  #allocation0 [shape = 'u32[]', space=smem, size = 0x4, offset = 0x4, fixed_abs, tag = 'smem constant byte address 0x4 - core index']
  #allocation1 [shape = 'u32[144,128]{1,0:T(1,128)}', space=vmem, size = 0x12000, scoped, tag = 'internal scratch']
  %s0 = inlined_call_operand.vmem [shape: f32[2,1,256], index: 0, kind: input, shape index: {}]
  %s1 = inlined_call_operand.vmem [shape: f32[32,3], index: 1, kind: input, shape index: {}]
  %s2 = inlined_call_operand.vmem [shape: bf16[3,32,96], index: 2, kind: input, shape index: {}]
  %s3 = inlined_call_operand.vmem [shape: bf16[1,96], index: 3, kind: input, shape index: {}]
  %s4 = inlined_call_operand.vmem [shape: f32[32,5], index: 4, kind: input, shape index: {}]
  %s5 = inlined_call_operand.hbm [shape: f32[2,1,256], index: 5, kind: output, shape index: {}]
  %s6 = sld [smem:[#allocation0]]
  $region53: #{tpu_custom_call.1} parent=0
    _
  %s8 = ssub.s32 1, %s6
  %s9 = scalar_select 0, %s8, %s6
  $region1: #{tpu_custom_call.1} parent=0
    #allocation2 [shape = 'u8[2048]{0}', space=vmem, size = 0x800, scoped, tag = 'output window, operand 0']
    #allocation3 [shape = 's32[2]{0}', space=sflag, size = 0x8, scoped, tag = 'scoped memory for tpu_custom_call.1']
    %10 = vsyncpa [#allocation3], 0
    %s11 = scalar_lea.sflag [#allocation3], 1
    %12 = vsyncpa %s11, 0
    loop: start=0, step=1, limit=4
    $region2: #{tpu_custom_call.1} parent=1 // loop_pre_header
      _
    $region3: #{tpu_custom_call.1} parent=1 // loop_header
      %s14 = sphi 0, %s18
      %p15 = scmp.ge.s32.totalorder %s14, 4
      %s24 = sphi 0, %s26
      %s27 = sphi 0, %s24
      %s28 = sphi 0, %s27
      %s44 = sphi 0, %s28
      %s48 = sphi 0, %s48
      %s50 = sphi 0, %s48
      %s51 = sphi 0, %s50
      %s65 = sphi 0, %s51
      %s69 = sphi 0, %s69
      %s71 = sphi 0, %s69
      %s72 = sphi 0, %s71
      %s86 = sphi 0, %s72
      %s90 = sphi 0, %s90
      %s92 = sphi 0, %s90
      %s93 = sphi 0, %s92
      %s107 = sphi 0, %s93
      %s111 = sphi 0, %s111
      %s113 = sphi 0, %s111
      %s114 = sphi 0, %s113
      %s128 = sphi 0, %s114
      %s134 = sphi 0, %s136
      %s137 = sphi 0, %s134
      %s138 = sphi 0, %s137
      %s154 = sphi 0, %s138
    $region4: #{tpu_custom_call.1} parent=1 // loop_header_branch
      %17 = sbr.rel (%p15) target = $region8
    $region5: #{tpu_custom_call.1} parent=1 // loop_body
      %s19 = ssub.s32 %s14, 1
      %s20 = ssub.s32 %s14, 2
      %s21 = sadd.s32 %s14, 1
      %s22 = ssub.s32 %s14, %s21
      %p23 = scmp.eq.s32.totalorder %s22, 0
      %s25 = sadd.s32 %s24, 1
      %s26 = scalar_select %p23, %s24, %s25
      %p29 = pneg %p23
      %p30 = scmp.eq.s32.totalorder %s14, 1
      %p31 = por %p29, %p30
      %p32 = scmp.ne.s32.totalorder %s24, %s27
      %p33 = scmp.eq.s32.totalorder %s14, 0
      %p34 = por %p32, %p33
      %p35 = scmp.ne.s32.totalorder %s24, %s27
      %p36 = scmp.eq.s32.totalorder %s19, 1
      %p37 = por %p35, %p36
      %p38 = scmp.ne.s32.totalorder %s27, %s28
      %p39 = scmp.eq.s32.totalorder %s19, 0
      %p40 = por %p38, %p39
      %p41 = scmp.ne.s32.totalorder %s27, %s28
      %p42 = scmp.eq.s32.totalorder %s20, 1
      %p43 = por %p41, %p42
      %p45 = scmp.ne.s32.totalorder %s28, %s44
      %p46 = scmp.eq.s32.totalorder %s20, 0
      %p47 = por %p45, %p46
      %s49 = sadd.s32 %s48, 1
      %p52 = scmp.eq.s32.totalorder %s14, 1
      %p53 = scmp.ne.s32.totalorder %s48, %s50
      %p54 = scmp.eq.s32.totalorder %s14, 0
      %p55 = por %p53, %p54
      %p56 = scmp.ne.s32.totalorder %s48, %s50
      %p57 = scmp.eq.s32.totalorder %s19, 1
      %p58 = por %p56, %p57
      %p59 = scmp.ne.s32.totalorder %s50, %s51
      %p60 = scmp.eq.s32.totalorder %s19, 0
      %p61 = por %p59, %p60
      %p62 = scmp.ne.s32.totalorder %s50, %s51
      %p63 = scmp.eq.s32.totalorder %s20, 1
      %p64 = por %p62, %p63
      %p66 = scmp.ne.s32.totalorder %s51, %s65
      %p67 = scmp.eq.s32.totalorder %s20, 0
      %p68 = por %p66, %p67
      %s70 = sadd.s32 %s69, 1
      %p73 = scmp.eq.s32.totalorder %s14, 1
      %p74 = scmp.ne.s32.totalorder %s69, %s71
      %p75 = scmp.eq.s32.totalorder %s14, 0
      %p76 = por %p74, %p75
      %p77 = scmp.ne.s32.totalorder %s69, %s71
      %p78 = scmp.eq.s32.totalorder %s19, 1
      %p79 = por %p77, %p78
      %p80 = scmp.ne.s32.totalorder %s71, %s72
      %p81 = scmp.eq.s32.totalorder %s19, 0
      %p82 = por %p80, %p81
      %p83 = scmp.ne.s32.totalorder %s71, %s72
      %p84 = scmp.eq.s32.totalorder %s20, 1
      %p85 = por %p83, %p84
      %p87 = scmp.ne.s32.totalorder %s72, %s86
      %p88 = scmp.eq.s32.totalorder %s20, 0
      %p89 = por %p87, %p88
      %s91 = sadd.s32 %s90, 1
      %p94 = scmp.eq.s32.totalorder %s14, 1
      %p95 = scmp.ne.s32.totalorder %s90, %s92
      %p96 = scmp.eq.s32.totalorder %s14, 0
      %p97 = por %p95, %p96
      %p98 = scmp.ne.s32.totalorder %s90, %s92
      %p99 = scmp.eq.s32.totalorder %s19, 1
      %p100 = por %p98, %p99
      %p101 = scmp.ne.s32.totalorder %s92, %s93
      %p102 = scmp.eq.s32.totalorder %s19, 0
      %p103 = por %p101, %p102
      %p104 = scmp.ne.s32.totalorder %s92, %s93
      %p105 = scmp.eq.s32.totalorder %s20, 1
      %p106 = por %p104, %p105
      %p108 = scmp.ne.s32.totalorder %s93, %s107
      %p109 = scmp.eq.s32.totalorder %s20, 0
      %p110 = por %p108, %p109
      %s112 = sadd.s32 %s111, 1
      %p115 = scmp.eq.s32.totalorder %s14, 1
      %p116 = scmp.ne.s32.totalorder %s111, %s113
      %p117 = scmp.eq.s32.totalorder %s14, 0
      %p118 = por %p116, %p117
      %p119 = scmp.ne.s32.totalorder %s111, %s113
      %p120 = scmp.eq.s32.totalorder %s19, 1
      %p121 = por %p119, %p120
      %p122 = scmp.ne.s32.totalorder %s113, %s114
      %p123 = scmp.eq.s32.totalorder %s19, 0
      %p124 = por %p122, %p123
      %p125 = scmp.ne.s32.totalorder %s113, %s114
      %p126 = scmp.eq.s32.totalorder %s20, 1
      %p127 = por %p125, %p126
      %p129 = scmp.ne.s32.totalorder %s114, %s128
      %p130 = scmp.eq.s32.totalorder %s20, 0
      %p131 = por %p129, %p130
      %s132 = ssub.s32 %s14, %s21
      %p133 = scmp.eq.s32.totalorder %s132, 0
      %s135 = sadd.s32 %s134, 1
      %s136 = scalar_select %p133, %s134, %s135
      %p139 = pneg %p133
      %p140 = scmp.eq.s32.totalorder %s14, 1
      %p141 = por %p139, %p140
      %p142 = scmp.ne.s32.totalorder %s134, %s137
      %p143 = scmp.eq.s32.totalorder %s14, 0
      %p144 = por %p142, %p143
      %p145 = scmp.ne.s32.totalorder %s134, %s137
      %p146 = scmp.eq.s32.totalorder %s19, 1
      %p147 = por %p145, %p146
      %p148 = scmp.ne.s32.totalorder %s137, %s138
      %p149 = scmp.eq.s32.totalorder %s19, 0
      %p150 = por %p148, %p149
      %p151 = scmp.ne.s32.totalorder %s137, %s138
      %p152 = scmp.eq.s32.totalorder %s20, 1
      %p153 = por %p151, %p152
      %p155 = scmp.ne.s32.totalorder %s138, %s154
      %p156 = scmp.eq.s32.totalorder %s20, 0
      %p157 = por %p155, %p156
      %p158 = scmp.le.s32.totalorder 1, %s14
      %p159 = scmp.lt.s32.totalorder %s14, 3
      %p160 = pnand %p158, %p159
      %p161 = pneg %p160
      // Predicated region
      $region9: #{tpu_custom_call.1} parent=5 // pred_check
        _
      $region10: #{tpu_custom_call.1} parent=5 // pred_check_branch
        %163 = sbr.rel (%p160) target = $region12
      $region11: #{tpu_custom_call.1} parent=5 // pred_region
        %s164 = ssub.s32 %s14, 1
        // Predicated region
        $region13: #{tpu_custom_call.1} parent=11 // pred_check
          %p165 = pneg %p61
        $region14: #{tpu_custom_call.1} parent=11 // pred_check_branch
          %167 = sbr.rel (%p165) target = $region16
        $region15: #{tpu_custom_call.1} parent=11 // pred_region
          _
        $region16: #{tpu_custom_call.1} parent=11 // pred_fallthru
          _
        // Predicated region
        $region17: #{tpu_custom_call.1} parent=11 // pred_check
          %p168 = pneg %p82
        $region18: #{tpu_custom_call.1} parent=11 // pred_check_branch
          %170 = sbr.rel (%p168) target = $region20
        $region19: #{tpu_custom_call.1} parent=11 // pred_region
          _
        $region20: #{tpu_custom_call.1} parent=11 // pred_fallthru
          _
        // Predicated region
        $region21: #{tpu_custom_call.1} parent=11 // pred_check
          %p171 = pneg %p103
        $region22: #{tpu_custom_call.1} parent=11 // pred_check_branch
          %173 = sbr.rel (%p171) target = $region24
        $region23: #{tpu_custom_call.1} parent=11 // pred_region
          _
        $region24: #{tpu_custom_call.1} parent=11 // pred_fallthru
          _
        // Predicated region
        $region25: #{tpu_custom_call.1} parent=11 // pred_check
          %p174 = pneg %p124
        $region26: #{tpu_custom_call.1} parent=11 // pred_check_branch
          %176 = sbr.rel (%p174) target = $region28
        $region27: #{tpu_custom_call.1} parent=11 // pred_region
          _
        $region28: #{tpu_custom_call.1} parent=11 // pred_fallthru
          _
      $region12: #{tpu_custom_call.1} parent=5 // pred_fallthru
        _
      %p177 = scmp.lt.s32.totalorder %s14, 2
      // Predicated region
      $region29: #{tpu_custom_call.1} parent=5 // pred_check
        %p178 = pneg %p177
      $region30: #{tpu_custom_call.1} parent=5 // pred_check_branch
        %180 = sbr.rel (%p178) target = $region32
      $region31: #{tpu_custom_call.1} parent=5 // pred_region
        // Predicated region
        $region33: #{tpu_custom_call.1} parent=31 // pred_check
          %p181 = pneg %p34
        $region34: #{tpu_custom_call.1} parent=31 // pred_check_branch
          %183 = sbr.rel (%p181) target = $region36
        $region35: #{tpu_custom_call.1} parent=31 // pred_region
          %p184 = scmp.lt.s32.totalorder %s14, 1
          %s185 = scalar_select %p184, %s14, 1
          %s186 = smul.addr %s185, 2
          %s187 = scalar_lea.vmem %s0, %s186
        $region36: #{tpu_custom_call.1} parent=31 // pred_fallthru
          _
      $region32: #{tpu_custom_call.1} parent=5 // pred_fallthru
        _
      %p188 = scmp.le.s32.totalorder 1, %s14
      %p189 = scmp.lt.s32.totalorder %s14, 3
      %p190 = pnand %p188, %p189
      %p191 = pneg %p190
      // Predicated region
      $region37: #{tpu_custom_call.1} parent=5 // pred_check
        _
      $region38: #{tpu_custom_call.1} parent=5 // pred_check_branch
        %193 = sbr.rel (%p190) target = $region40
      $region39: #{tpu_custom_call.1} parent=5 // pred_region
        %s194 = ssub.s32 %s14, 1
        %p195 = scmp.lt.s32.totalorder %s19, 1
        %s196 = scalar_select %p195, %s19, 1
        %s197 = smul.addr %s196, 2
        %s198 = scalar_lea.vmem %s0, %s197
        %p199 = pneg %p40
        %p200 = pneg %p37
        %p201 = pneg %p61
        %p202 = pneg %p58
        %p203 = pneg %p82
        %p204 = pneg %p79
        %p205 = pneg %p103
        %p206 = pneg %p100
        %p207 = pneg %p124
        %p208 = pneg %p121
        %p209 = pneg %p150
        %p210 = pneg %p147
        %s211 = sand.u32 %s137, 1
        %s212 = scalar_lea.sflag [#allocation3], %s211
        %s213 = sand.u32 %s137, 1
        %s214 = smul.addr %s213, 2
        %s215 = scalar_lea.vmem [#allocation2], %s214
        %p216 = scmp.lt.s32.totalorder %s19, 1
        %s217 = scalar_select %p216, %s19, 1
        %s218 = smul.addr %s217, 2
        %s219 = scalar_lea.vmem %s0, %s218
        %v221 = vld [vmem:[%s219] sm:$0x3]
        %v222 = vlaneseq
        %v223 = vand.u32 %v222, 127
        %v224 = vadd.s32 %v223, 128
        %v226 = vlaneseq
        %v227 = vshrl.u32 %v226, 7
        %v228 = vsub.s32 0, %v227
        %v229 = vrot.slane %v221, %v228
        %v230 = vlaneseq
        %v231 = vshrl.u32 %v230, 7
        %v232 = vsub.s32 1, %v231
        %v233 = vrot.slane %v221, %v232
        %236 = vrot.lane.b32.xlu0 %v229, 1
        %v237 = vpop.permute.xlu0 %236
        %238 = vrot.lane.b32.xlu0 %v233, 1
        %v239 = vpop.permute.xlu0 %238
        %vm240 = vcmp.lt.s32.totalorder %v223, 1
        %v241 = vsel %vm240, %v237, %v239
        %v242 = vsel %vm240, %v239, %v237
        %v243 = vadd.s32 %v223, 4294967295
        %v244 = vadd.s32 %v224, 4294967295
        %vm245 = vcmp.ge.s32.totalorder %v243, 0
        %vm246 = vcmp.ge.s32.totalorder %v244, 0
        %vm247 = vcmp.lt.s32.totalorder %v243, 256
        %vm248 = vcmp.lt.s32.totalorder %v244, 256
        %vm249 = vmand %vm245, %vm247
        %vm250 = vmand %vm246, %vm248
        %v251 = vsel %vm249, %v242, 0.0
        %v252 = vsel %vm250, %v241, 0.0
        %253 = vrot.lane.b32.xlu0 %v229, 127
        %v254 = vpop.permute.xlu0 %253
        %255 = vrot.lane.b32.xlu0 %v233, 127
        %v256 = vpop.permute.xlu0 %255
        %vm257 = vcmp.lt.s32.totalorder %v223, 127
        %v258 = vsel %vm257, %v254, %v256
        %v259 = vsel %vm257, %v256, %v254
        %v260 = vadd.s32 %v223, 1
        %v261 = vadd.s32 %v224, 1
        %vm262 = vcmp.ge.s32.totalorder %v260, 0
        %vm263 = vcmp.ge.s32.totalorder %v261, 0
        %vm264 = vcmp.lt.s32.totalorder %v260, 256
        %vm265 = vcmp.lt.s32.totalorder %v261, 256
        %vm266 = vmand %vm262, %vm264
        %vm267 = vmand %vm263, %vm265
        %v268 = vsel %vm266, %v258, 0.0
        %v269 = vsel %vm267, %v259, 0.0
        %v270 = vld [vmem:[%s1] sm:$0xff]
        %v271 = vld [vmem:[%s1 + $0x8] sm:$0xff]
        %v272 = vld [vmem:[%s1 + $0x10] sm:$0xff]
        %v273 = vld [vmem:[%s1 + $0x18] sm:$0xff]
        %275 = vset.pattern.permute.xlu0 0
        %276 = vperm.xlu0 %275, %v270
        %v277 = vpop.permute.xlu0 %276
        %280 = vset.pattern.permute.xlu0 0
        %281 = vperm.xlu0 %280, %v271
        %v282 = vpop.permute.xlu0 %281
        %285 = vset.pattern.permute.xlu0 0
        %286 = vperm.xlu0 %285, %v272
        %v287 = vpop.permute.xlu0 %286
        %290 = vset.pattern.permute.xlu0 0
        %291 = vperm.xlu0 %290, %v273
        %v292 = vpop.permute.xlu0 %291
        %v294 = vlaneseq
        %v295 = vshrl.u32 %v294, 7
        %v296 = vsub.s32 0, %v295
        %v297 = vrot.slane %v251, %v296
        %v298 = vlaneseq
        %v299 = vshrl.u32 %v298, 7
        %v300 = vsub.s32 0, %v299
        %v301 = vrot.slane %v252, %v300
        %v302 = vmul.f32 %v277, %v297
        %v303 = vmul.f32 %v277, %v301
        %v304 = vmul.f32 %v282, %v297
        %v305 = vmul.f32 %v282, %v301
        %v306 = vmul.f32 %v287, %v297
        %v307 = vmul.f32 %v287, %v301
        %v308 = vmul.f32 %v292, %v297
        %v309 = vmul.f32 %v292, %v301
        %v310 = vadd.f32 %v302, 0.0
        %v311 = vadd.f32 %v303, 0.0
        %v312 = vadd.f32 %v304, 0.0
        %v313 = vadd.f32 %v305, 0.0
        %v314 = vadd.f32 %v306, 0.0
        %v315 = vadd.f32 %v307, 0.0
        %v316 = vadd.f32 %v308, 0.0
        %v317 = vadd.f32 %v309, 0.0
        %318 = vset.pattern.permute.xlu0 1
        %319 = vperm.xlu0 %318, %v270
        %v320 = vpop.permute.xlu0 %319
        %322 = vset.pattern.permute.xlu0 1
        %323 = vperm.xlu0 %322, %v271
        %v324 = vpop.permute.xlu0 %323
        %326 = vset.pattern.permute.xlu0 1
        %327 = vperm.xlu0 %326, %v272
        %v328 = vpop.permute.xlu0 %327
        %330 = vset.pattern.permute.xlu0 1
        %331 = vperm.xlu0 %330, %v273
        %v332 = vpop.permute.xlu0 %331
        %v334 = vmul.f32 %v320, %v229
        %v335 = vmul.f32 %v320, %v233
        %v336 = vmul.f32 %v324, %v229
        %v337 = vmul.f32 %v324, %v233
        %v338 = vmul.f32 %v328, %v229
        %v339 = vmul.f32 %v328, %v233
        %v340 = vmul.f32 %v332, %v229
        %v341 = vmul.f32 %v332, %v233
        %v342 = vadd.f32 %v310, %v334
        %v343 = vadd.f32 %v311, %v335
        %v344 = vadd.f32 %v312, %v336
        %v345 = vadd.f32 %v313, %v337
        %v346 = vadd.f32 %v314, %v338
        %v347 = vadd.f32 %v315, %v339
        %v348 = vadd.f32 %v316, %v340
        %v349 = vadd.f32 %v317, %v341
        %350 = vset.pattern.permute.xlu0 2
        %351 = vperm.xlu0 %350, %v270
        %v352 = vpop.permute.xlu0 %351
        %354 = vset.pattern.permute.xlu0 2
        %355 = vperm.xlu0 %354, %v271
        %v356 = vpop.permute.xlu0 %355
        %358 = vset.pattern.permute.xlu0 2
        %359 = vperm.xlu0 %358, %v272
        %v360 = vpop.permute.xlu0 %359
        %362 = vset.pattern.permute.xlu0 2
        %363 = vperm.xlu0 %362, %v273
        %v364 = vpop.permute.xlu0 %363
        %v366 = vlaneseq
        %v367 = vshrl.u32 %v366, 7
        %v368 = vsub.s32 0, %v367
        %v369 = vrot.slane %v268, %v368
        %v370 = vlaneseq
        %v371 = vshrl.u32 %v370, 7
        %v372 = vsub.s32 0, %v371
        %v373 = vrot.slane %v269, %v372
        %v374 = vmul.f32 %v352, %v369
        %v375 = vmul.f32 %v352, %v373
        %v376 = vmul.f32 %v356, %v369
        %v377 = vmul.f32 %v356, %v373
        %v378 = vmul.f32 %v360, %v369
        %v379 = vmul.f32 %v360, %v373
        %v380 = vmul.f32 %v364, %v369
        %v381 = vmul.f32 %v364, %v373
        %v382 = vadd.f32 %v342, %v374
        %v383 = vadd.f32 %v343, %v375
        %v384 = vadd.f32 %v344, %v376
        %v385 = vadd.f32 %v345, %v377
        %v386 = vadd.f32 %v346, %v378
        %v387 = vadd.f32 %v347, %v379
        %v388 = vadd.f32 %v348, %v380
        %v389 = vadd.f32 %v349, %v381
        %v390 = vld [vmem:[%s4] sm:$0xff]
        %v391 = vld [vmem:[%s4 + $0x8] sm:$0xff]
        %v392 = vld [vmem:[%s4 + $0x10] sm:$0xff]
        %v393 = vld [vmem:[%s4 + $0x18] sm:$0xff]
        %395 = vset.pattern.permute.xlu0 0
        %396 = vperm.xlu0 %395, %v390
        %v397 = vpop.permute.xlu0 %396
        %400 = vset.pattern.permute.xlu0 0
        %401 = vperm.xlu0 %400, %v391
        %v402 = vpop.permute.xlu0 %401
        %405 = vset.pattern.permute.xlu0 0
        %406 = vperm.xlu0 %405, %v392
        %v407 = vpop.permute.xlu0 %406
        %410 = vset.pattern.permute.xlu0 0
        %411 = vperm.xlu0 %410, %v393
        %v412 = vpop.permute.xlu0 %411
        %v414 = vadd.f32 %v382, %v397
        %v415 = vadd.f32 %v383, %v397
        %v416 = vadd.f32 %v384, %v402
        %v417 = vadd.f32 %v385, %v402
        %v418 = vadd.f32 %v386, %v407
        %v419 = vadd.f32 %v387, %v407
        %v420 = vadd.f32 %v388, %v412
        %v421 = vadd.f32 %v389, %v412
        %vm422 = vcmp.ge.f32.partialorder %v414, 0.0
        %vm423 = vcmp.ge.f32.partialorder %v415, 0.0
        %vm424 = vcmp.ge.f32.partialorder %v416, 0.0
        %vm425 = vcmp.ge.f32.partialorder %v417, 0.0
        %vm426 = vcmp.ge.f32.partialorder %v418, 0.0
        %vm427 = vcmp.ge.f32.partialorder %v419, 0.0
        %vm428 = vcmp.ge.f32.partialorder %v420, 0.0
        %vm429 = vcmp.ge.f32.partialorder %v421, 0.0
        %v430 = vmul.f32 %v414, 0.2
        %v431 = vmul.f32 %v415, 0.2
        %v432 = vmul.f32 %v416, 0.2
        %v433 = vmul.f32 %v417, 0.2
        %v434 = vmul.f32 %v418, 0.2
        %v435 = vmul.f32 %v419, 0.2
        %v436 = vmul.f32 %v420, 0.2
        %v437 = vmul.f32 %v421, 0.2
        %v438 = vsel %vm422, %v414, %v430
        %v439 = vsel %vm423, %v415, %v431
        %v440 = vsel %vm424, %v416, %v432
        %v441 = vsel %vm425, %v417, %v433
        %v442 = vsel %vm426, %v418, %v434
        %v443 = vsel %vm427, %v419, %v435
        %v444 = vsel %vm428, %v420, %v436
        %v445 = vsel %vm429, %v421, %v437
        %v446 = vld [vmem:[%s2] sm:$0xf]
        %v447 = vld [vmem:[%s2 + $0x4] sm:$0xf]
        %v448 = vld [vmem:[%s2 + $0x8] sm:$0xf]
        %v449 = vld [vmem:[%s2 + $0xc] sm:$0xf]
        %450 = vrot.lane.b32.xlu0 %v438, 2
        %v451 = vpop.permute.xlu0 %450
        %452 = vrot.lane.b32.xlu0 %v440, 2
        %v453 = vpop.permute.xlu0 %452
        %454 = vrot.lane.b32.xlu0 %v442, 2
        %v455 = vpop.permute.xlu0 %454
        %456 = vrot.lane.b32.xlu0 %v444, 2
        %v457 = vpop.permute.xlu0 %456
        %458 = vrot.lane.b32.xlu0 %v439, 2
        %v459 = vpop.permute.xlu0 %458
        %460 = vrot.lane.b32.xlu0 %v441, 2
        %v461 = vpop.permute.xlu0 %460
        %462 = vrot.lane.b32.xlu0 %v443, 2
        %v463 = vpop.permute.xlu0 %462
        %464 = vrot.lane.b32.xlu0 %v445, 2
        %v465 = vpop.permute.xlu0 %464
        %vm466 = vcmp.lt.s32.totalorder %v223, 2
        %v467 = vsel %vm466, %v451, %v459
        %v468 = vsel %vm466, %v453, %v461
        %v469 = vsel %vm466, %v455, %v463
        %v470 = vsel %vm466, %v457, %v465
        %v471 = vsel %vm466, %v459, %v451
        %v472 = vsel %vm466, %v461, %v453
        %v473 = vsel %vm466, %v463, %v455
        %v474 = vsel %vm466, %v465, %v457
        %v475 = vadd.s32 %v223, 4294967294
        %v476 = vadd.s32 %v224, 4294967294
        %vm477 = vcmp.ge.s32.totalorder %v475, 0
        %vm478 = vcmp.ge.s32.totalorder %v476, 0
        %vm479 = vcmp.lt.s32.totalorder %v475, 256
        %vm480 = vcmp.lt.s32.totalorder %v476, 256
        %vm481 = vmand %vm477, %vm479
        %vm482 = vmand %vm478, %vm480
        %v483 = vsel %vm481, %v471, 0.0
        %v484 = vsel %vm482, %v467, 0.0
        %v485 = vsel %vm481, %v472, 0.0
        %v486 = vsel %vm482, %v468, 0.0
        %v487 = vsel %vm481, %v473, 0.0
        %v488 = vsel %vm482, %v469, 0.0
        %v489 = vsel %vm481, %v474, 0.0
        %v490 = vsel %vm482, %v470, 0.0
        %491 = vrot.lane.b32.xlu0 %v438, 126
        %v492 = vpop.permute.xlu0 %491
        %493 = vrot.lane.b32.xlu0 %v440, 126
        %v494 = vpop.permute.xlu0 %493
        %495 = vrot.lane.b32.xlu0 %v442, 126
        %v496 = vpop.permute.xlu0 %495
        %497 = vrot.lane.b32.xlu0 %v444, 126
        %v498 = vpop.permute.xlu0 %497
        %499 = vrot.lane.b32.xlu0 %v439, 126
        %v500 = vpop.permute.xlu0 %499
        %501 = vrot.lane.b32.xlu0 %v441, 126
        %v502 = vpop.permute.xlu0 %501
        %503 = vrot.lane.b32.xlu0 %v443, 126
        %v504 = vpop.permute.xlu0 %503
        %505 = vrot.lane.b32.xlu0 %v445, 126
        %v506 = vpop.permute.xlu0 %505
        %vm507 = vcmp.lt.s32.totalorder %v223, 126
        %v508 = vsel %vm507, %v492, %v500
        %v509 = vsel %vm507, %v494, %v502
        %v510 = vsel %vm507, %v496, %v504
        %v511 = vsel %vm507, %v498, %v506
        %v512 = vsel %vm507, %v500, %v492
        %v513 = vsel %vm507, %v502, %v494
        %v514 = vsel %vm507, %v504, %v496
        %v515 = vsel %vm507, %v506, %v498
        %v516 = vadd.s32 %v223, 2
        %v517 = vadd.s32 %v224, 2
        %vm518 = vcmp.ge.s32.totalorder %v516, 0
        %vm519 = vcmp.ge.s32.totalorder %v517, 0
        %vm520 = vcmp.lt.s32.totalorder %v516, 256
        %vm521 = vcmp.lt.s32.totalorder %v517, 256
        %vm522 = vmand %vm518, %vm520
        %vm523 = vmand %vm519, %vm521
        %v524 = vsel %vm522, %v508, 0.0
        %v525 = vsel %vm523, %v512, 0.0
        %v526 = vsel %vm522, %v509, 0.0
        %v527 = vsel %vm523, %v513, 0.0
        %v528 = vsel %vm522, %v510, 0.0
        %v529 = vsel %vm523, %v514, 0.0
        %v530 = vsel %vm522, %v511, 0.0
        %v531 = vsel %vm523, %v515, 0.0
        %v532 = vpack.c.bf16 %v485, %v483
        %v533 = vpack.c.bf16 %v486, %v484
        %v534 = vpack.c.bf16 %v489, %v487
        %v535 = vpack.c.bf16 %v490, %v488
        %v536 = vpack.c.bf16 %v440, %v438
        %v537 = vpack.c.bf16 %v441, %v439
        %v538 = vpack.c.bf16 %v444, %v442
        %v539 = vpack.c.bf16 %v445, %v443
        %v540 = vpack.c.bf16 %v526, %v524
        %v541 = vpack.c.bf16 %v527, %v525
        %v542 = vpack.c.bf16 %v530, %v528
        %v543 = vpack.c.bf16 %v531, %v529
        %544 = vset.pattern.permute.xlu0 1
        %545 = vperm.xlu0 %544, %v390
        %v546 = vpop.permute.xlu0 %545
        %548 = vset.pattern.permute.xlu0 1
        %549 = vperm.xlu0 %548, %v391
        %v550 = vpop.permute.xlu0 %549
        %552 = vset.pattern.permute.xlu0 1
        %553 = vperm.xlu0 %552, %v392
        %v554 = vpop.permute.xlu0 %553
        %556 = vset.pattern.permute.xlu0 1
        %557 = vperm.xlu0 %556, %v393
        %v558 = vpop.permute.xlu0 %557
        %v564 = vunpack.c.l.b16 %v446
        %v565 = vunpack.c.l.b16 %v447
        %v566 = vunpack.c.l.b16 %v448
        %v567 = vunpack.c.l.b16 %v449
        %v568 = vpack.c.b16 %v565, %v564
        %v569 = vpack.c.b16 %v567, %v566
        %vm570 = vcmask 785408
        %v572 = vsel %vm570, %v568, 0
        %v575 = vsel %vm570, %v569, 0
        %577 = vmatprep.subr.bf16.mxu0 %v533
        %578 = vmatpush1.bf16.msra.mxu0 %v532
        %579 = vmatprep.subr.bf16.mxu0 %v535
        %580 = vmatpush1.bf16.msra.mxu0 %v534
        %581 = vmatprep.subr.bf16.mxu0 %v537
        %582 = vmatpush1.bf16.msra.mxu0 %v536
        %583 = vmatprep.subr.bf16.mxu0 %v539
        %584 = vmatpush1.bf16.msra.mxu0 %v538
        %585 = vmatprep.subr.bf16.mxu0 %v541
        %586 = vmatpush1.bf16.msra.mxu0 %v540
        %587 = vmatprep.subr.bf16.mxu0 %v543
        %588 = vmatpush1.bf16.msra.mxu0 %v542
        %589 = vmatprep.subr.bf16.mxu0 0
        %590 = vmatpush1.bf16.msra.mxu0 0
        %591 = vmatprep.subr.bf16.mxu0 0
        %592 = vmatpush1.bf16.msra.mxu0 0
        %593 = vmatprep.subr.bf16.mxu0 0
        %594 = vmatpush1.bf16.msra.mxu0 0
        %595 = vmatprep.subr.bf16.mxu0 0
        %596 = vmatpush1.bf16.msra.mxu0 0
        %597 = vmatprep.subr.bf16.mxu0 0
        %598 = vmatpush1.bf16.msra.mxu0 0
        %599 = vmatprep.subr.bf16.mxu0 0
        %600 = vmatpush1.bf16.msra.mxu0 0
        %601 = vmatprep.subr.bf16.mxu0 0
        %602 = vmatpush1.bf16.msra.mxu0 0
        %603 = vmatprep.subr.bf16.mxu0 0
        %604 = vmatpush1.bf16.msra.mxu0 0
        %605 = vmatprep.subr.bf16.mxu0 0
        %606 = vmatpush1.bf16.msra.mxu0 0
        %607 = vmatprep.subr.bf16.mxu0 0
        %608 = vmatpush1.bf16.msra.mxu0 0
        %609 = vmatprep.mubr.bf16.mxu0 0
        %610 = vmatmul.mubr.bf16.gmra.mrb[0].mxu0 %v572
        %v611 = vpop.f32.mrb[0].mxu0
        %v612 = vadd.f32 %v546, %v611
        %v613 = vpop.f32.mrb[0].mxu0
        %v614 = vadd.f32 %v546, %v613
        %v615 = vpop.f32.mrb[0].mxu0
        %v616 = vadd.f32 %v550, %v615
        %v617 = vpop.f32.mrb[0].mxu0
        %v618 = vadd.f32 %v550, %v617
        %619 = vmatprep.mubr.bf16.mxu0 0
        %620 = vmatmul.mubr.bf16.gmra.mrb[0].mxu0 %v575
        %v621 = vpop.f32.mrb[0].mxu0
        %v622 = vadd.f32 %v554, %v621
        %v623 = vpop.f32.mrb[0].mxu0
        %v624 = vadd.f32 %v554, %v623
        %v625 = vpop.f32.mrb[0].mxu0
        %v626 = vadd.f32 %v558, %v625
        %v627 = vpop.f32.mrb[0].mxu0
        %v628 = vadd.f32 %v558, %v627
        %629 = vdwg.mxu0
        %vm630 = vcmp.ge.f32.partialorder %v612, 0.0
        %vm631 = vcmp.ge.f32.partialorder %v614, 0.0
        %vm632 = vcmp.ge.f32.partialorder %v616, 0.0
        %vm633 = vcmp.ge.f32.partialorder %v618, 0.0
        %vm634 = vcmp.ge.f32.partialorder %v622, 0.0
        %vm635 = vcmp.ge.f32.partialorder %v624, 0.0
        %vm636 = vcmp.ge.f32.partialorder %v626, 0.0
        %vm637 = vcmp.ge.f32.partialorder %v628, 0.0
        %v638 = vmul.f32 %v612, 0.2
        %v639 = vmul.f32 %v614, 0.2
        %v640 = vmul.f32 %v616, 0.2
        %v641 = vmul.f32 %v618, 0.2
        %v642 = vmul.f32 %v622, 0.2
        %v643 = vmul.f32 %v624, 0.2
        %v644 = vmul.f32 %v626, 0.2
        %v645 = vmul.f32 %v628, 0.2
        %v646 = vsel %vm630, %v612, %v638
        %v647 = vsel %vm631, %v614, %v639
        %v648 = vsel %vm632, %v616, %v640
        %v649 = vsel %vm633, %v618, %v641
        %v650 = vsel %vm634, %v622, %v642
        %v651 = vsel %vm635, %v624, %v643
        %v652 = vsel %vm636, %v626, %v644
        %v653 = vsel %vm637, %v628, %v645
        %s654 = scalar_lea.vmem %s2, 16
        %v655 = vld [vmem:[%s654] sm:$0xf]
        %v656 = vld [vmem:[%s654 + $0x4] sm:$0xf]
        %v657 = vld [vmem:[%s654 + $0x8] sm:$0xf]
        %v658 = vld [vmem:[%s654 + $0xc] sm:$0xf]
        %659 = vrot.lane.b32.xlu0 %v646, 4
        %v660 = vpop.permute.xlu0 %659
        %661 = vrot.lane.b32.xlu0 %v648, 4
        %v662 = vpop.permute.xlu0 %661
        %663 = vrot.lane.b32.xlu0 %v650, 4
        %v664 = vpop.permute.xlu0 %663
        %665 = vrot.lane.b32.xlu0 %v652, 4
        %v666 = vpop.permute.xlu0 %665
        %667 = vrot.lane.b32.xlu0 %v647, 4
        %v668 = vpop.permute.xlu0 %667
        %669 = vrot.lane.b32.xlu0 %v649, 4
        %v670 = vpop.permute.xlu0 %669
        %671 = vrot.lane.b32.xlu0 %v651, 4
        %v672 = vpop.permute.xlu0 %671
        %673 = vrot.lane.b32.xlu0 %v653, 4
        %v674 = vpop.permute.xlu0 %673
        %vm675 = vcmp.lt.s32.totalorder %v223, 4
        %v676 = vsel %vm675, %v660, %v668
        %v677 = vsel %vm675, %v662, %v670
        %v678 = vsel %vm675, %v664, %v672
        %v679 = vsel %vm675, %v666, %v674
        %v680 = vsel %vm675, %v668, %v660
        %v681 = vsel %vm675, %v670, %v662
        %v682 = vsel %vm675, %v672, %v664
        %v683 = vsel %vm675, %v674, %v666
        %v684 = vadd.s32 %v223, 4294967292
        %v685 = vadd.s32 %v224, 4294967292
        %vm686 = vcmp.ge.s32.totalorder %v684, 0
        %vm687 = vcmp.ge.s32.totalorder %v685, 0
        %vm688 = vcmp.lt.s32.totalorder %v684, 256
        %vm689 = vcmp.lt.s32.totalorder %v685, 256
        %vm690 = vmand %vm686, %vm688
        %vm691 = vmand %vm687, %vm689
        %v692 = vsel %vm690, %v680, 0.0
        %v693 = vsel %vm691, %v676, 0.0
        %v694 = vsel %vm690, %v681, 0.0
        %v695 = vsel %vm691, %v677, 0.0
        %v696 = vsel %vm690, %v682, 0.0
        %v697 = vsel %vm691, %v678, 0.0
        %v698 = vsel %vm690, %v683, 0.0
        %v699 = vsel %vm691, %v679, 0.0
        %700 = vrot.lane.b32.xlu0 %v646, 124
        %v701 = vpop.permute.xlu0 %700
        %702 = vrot.lane.b32.xlu0 %v648, 124
        %v703 = vpop.permute.xlu0 %702
        %704 = vrot.lane.b32.xlu0 %v650, 124
        %v705 = vpop.permute.xlu0 %704
        %706 = vrot.lane.b32.xlu0 %v652, 124
        %v707 = vpop.permute.xlu0 %706
        %708 = vrot.lane.b32.xlu0 %v647, 124
        %v709 = vpop.permute.xlu0 %708
        %710 = vrot.lane.b32.xlu0 %v649, 124
        %v711 = vpop.permute.xlu0 %710
        %712 = vrot.lane.b32.xlu0 %v651, 124
        %v713 = vpop.permute.xlu0 %712
        %714 = vrot.lane.b32.xlu0 %v653, 124
        %v715 = vpop.permute.xlu0 %714
        %vm716 = vcmp.lt.s32.totalorder %v223, 124
        %v717 = vsel %vm716, %v701, %v709
        %v718 = vsel %vm716, %v703, %v711
        %v719 = vsel %vm716, %v705, %v713
        %v720 = vsel %vm716, %v707, %v715
        %v721 = vsel %vm716, %v709, %v701
        %v722 = vsel %vm716, %v711, %v703
        %v723 = vsel %vm716, %v713, %v705
        %v724 = vsel %vm716, %v715, %v707
        %v725 = vadd.s32 %v223, 4
        %v726 = vadd.s32 %v224, 4
        %vm727 = vcmp.ge.s32.totalorder %v725, 0
        %vm728 = vcmp.ge.s32.totalorder %v726, 0
        %vm729 = vcmp.lt.s32.totalorder %v725, 256
        %vm730 = vcmp.lt.s32.totalorder %v726, 256
        %vm731 = vmand %vm727, %vm729
        %vm732 = vmand %vm728, %vm730
        %v733 = vsel %vm731, %v717, 0.0
        %v734 = vsel %vm732, %v721, 0.0
        %v735 = vsel %vm731, %v718, 0.0
        %v736 = vsel %vm732, %v722, 0.0
        %v737 = vsel %vm731, %v719, 0.0
        %v738 = vsel %vm732, %v723, 0.0
        %v739 = vsel %vm731, %v720, 0.0
        %v740 = vsel %vm732, %v724, 0.0
        %v741 = vpack.c.bf16 %v694, %v692
        %v742 = vpack.c.bf16 %v695, %v693
        %v743 = vpack.c.bf16 %v698, %v696
        %v744 = vpack.c.bf16 %v699, %v697
        %v745 = vpack.c.bf16 %v648, %v646
        %v746 = vpack.c.bf16 %v649, %v647
        %v747 = vpack.c.bf16 %v652, %v650
        %v748 = vpack.c.bf16 %v653, %v651
        %v749 = vpack.c.bf16 %v735, %v733
        %v750 = vpack.c.bf16 %v736, %v734
        %v751 = vpack.c.bf16 %v739, %v737
        %v752 = vpack.c.bf16 %v740, %v738
        %753 = vset.pattern.permute.xlu0 2
        %754 = vperm.xlu0 %753, %v390
        %v755 = vpop.permute.xlu0 %754
        %757 = vset.pattern.permute.xlu0 2
        %758 = vperm.xlu0 %757, %v391
        %v759 = vpop.permute.xlu0 %758
        %761 = vset.pattern.permute.xlu0 2
        %762 = vperm.xlu0 %761, %v392
        %v763 = vpop.permute.xlu0 %762
        %765 = vset.pattern.permute.xlu0 2
        %766 = vperm.xlu0 %765, %v393
        %v767 = vpop.permute.xlu0 %766
        %v773 = vunpack.c.l.b16 %v655
        %v774 = vunpack.c.l.b16 %v656
        %v775 = vunpack.c.l.b16 %v657
        %v776 = vunpack.c.l.b16 %v658
        %v777 = vpack.c.b16 %v774, %v773
        %v778 = vpack.c.b16 %v776, %v775
        %v780 = vsel %vm570, %v777, 0
        %v783 = vsel %vm570, %v778, 0
        %785 = vmatprep.subr.bf16.mxu0 %v742
        %786 = vmatpush1.bf16.msra.mxu0 %v741
        %787 = vmatprep.subr.bf16.mxu0 %v744
        %788 = vmatpush1.bf16.msra.mxu0 %v743
        %789 = vmatprep.subr.bf16.mxu0 %v746
        %790 = vmatpush1.bf16.msra.mxu0 %v745
        %791 = vmatprep.subr.bf16.mxu0 %v748
        %792 = vmatpush1.bf16.msra.mxu0 %v747
        %793 = vmatprep.subr.bf16.mxu0 %v750
        %794 = vmatpush1.bf16.msra.mxu0 %v749
        %795 = vmatprep.subr.bf16.mxu0 %v752
        %796 = vmatpush1.bf16.msra.mxu0 %v751
        %797 = vmatprep.subr.bf16.mxu0 0
        %798 = vmatpush1.bf16.msra.mxu0 0
        %799 = vmatprep.subr.bf16.mxu0 0
        %800 = vmatpush1.bf16.msra.mxu0 0
        %801 = vmatprep.subr.bf16.mxu0 0
        %802 = vmatpush1.bf16.msra.mxu0 0
        %803 = vmatprep.subr.bf16.mxu0 0
        %804 = vmatpush1.bf16.msra.mxu0 0
        %805 = vmatprep.subr.bf16.mxu0 0
        %806 = vmatpush1.bf16.msra.mxu0 0
        %807 = vmatprep.subr.bf16.mxu0 0
        %808 = vmatpush1.bf16.msra.mxu0 0
        %809 = vmatprep.subr.bf16.mxu0 0
        %810 = vmatpush1.bf16.msra.mxu0 0
        %811 = vmatprep.subr.bf16.mxu0 0
        %812 = vmatpush1.bf16.msra.mxu0 0
        %813 = vmatprep.subr.bf16.mxu0 0
        %814 = vmatpush1.bf16.msra.mxu0 0
        %815 = vmatprep.subr.bf16.mxu0 0
        %816 = vmatpush1.bf16.msra.mxu0 0
        %817 = vmatprep.mubr.bf16.mxu0 0
        %818 = vmatmul.mubr.bf16.gmra.mrb[0].mxu0 %v780
        %v819 = vpop.f32.mrb[0].mxu0
        %v820 = vadd.f32 %v755, %v819
        %v821 = vpop.f32.mrb[0].mxu0
        %v822 = vadd.f32 %v755, %v821
        %v823 = vpop.f32.mrb[0].mxu0
        %v824 = vadd.f32 %v759, %v823
        %v825 = vpop.f32.mrb[0].mxu0
        %v826 = vadd.f32 %v759, %v825
        %827 = vmatprep.mubr.bf16.mxu0 0
        %828 = vmatmul.mubr.bf16.gmra.mrb[0].mxu0 %v783
        %v829 = vpop.f32.mrb[0].mxu0
        %v830 = vadd.f32 %v763, %v829
        %v831 = vpop.f32.mrb[0].mxu0
        %v832 = vadd.f32 %v763, %v831
        %v833 = vpop.f32.mrb[0].mxu0
        %v834 = vadd.f32 %v767, %v833
        %v835 = vpop.f32.mrb[0].mxu0
        %v836 = vadd.f32 %v767, %v835
        %837 = vdwg.mxu0
        %vm838 = vcmp.ge.f32.partialorder %v820, 0.0
        %vm839 = vcmp.ge.f32.partialorder %v822, 0.0
        %vm840 = vcmp.ge.f32.partialorder %v824, 0.0
        %vm841 = vcmp.ge.f32.partialorder %v826, 0.0
        %vm842 = vcmp.ge.f32.partialorder %v830, 0.0
        %vm843 = vcmp.ge.f32.partialorder %v832, 0.0
        %vm844 = vcmp.ge.f32.partialorder %v834, 0.0
        %vm845 = vcmp.ge.f32.partialorder %v836, 0.0
        %v846 = vmul.f32 %v820, 0.2
        %v847 = vmul.f32 %v822, 0.2
        %v848 = vmul.f32 %v824, 0.2
        %v849 = vmul.f32 %v826, 0.2
        %v850 = vmul.f32 %v830, 0.2
        %v851 = vmul.f32 %v832, 0.2
        %v852 = vmul.f32 %v834, 0.2
        %v853 = vmul.f32 %v836, 0.2
        %v854 = vsel %vm838, %v820, %v846
        %v855 = vsel %vm839, %v822, %v847
        %v856 = vsel %vm840, %v824, %v848
        %v857 = vsel %vm841, %v826, %v849
        %v858 = vsel %vm842, %v830, %v850
        %v859 = vsel %vm843, %v832, %v851
        %v860 = vsel %vm844, %v834, %v852
        %v861 = vsel %vm845, %v836, %v853
        %s862 = scalar_lea.vmem %s2, 32
        %v863 = vld [vmem:[%s862] sm:$0xf]
        %v864 = vld [vmem:[%s862 + $0x4] sm:$0xf]
        %v865 = vld [vmem:[%s862 + $0x8] sm:$0xf]
        %v866 = vld [vmem:[%s862 + $0xc] sm:$0xf]
        %867 = vrot.lane.b32.xlu0 %v854, 8
        %v868 = vpop.permute.xlu0 %867
        %869 = vrot.lane.b32.xlu0 %v856, 8
        %v870 = vpop.permute.xlu0 %869
        %871 = vrot.lane.b32.xlu0 %v858, 8
        %v872 = vpop.permute.xlu0 %871
        %873 = vrot.lane.b32.xlu0 %v860, 8
        %v874 = vpop.permute.xlu0 %873
        %875 = vrot.lane.b32.xlu0 %v855, 8
        %v876 = vpop.permute.xlu0 %875
        %877 = vrot.lane.b32.xlu0 %v857, 8
        %v878 = vpop.permute.xlu0 %877
        %879 = vrot.lane.b32.xlu0 %v859, 8
        %v880 = vpop.permute.xlu0 %879
        %881 = vrot.lane.b32.xlu0 %v861, 8
        %v882 = vpop.permute.xlu0 %881
        %vm883 = vcmp.lt.s32.totalorder %v223, 8
        %v884 = vsel %vm883, %v868, %v876
        %v885 = vsel %vm883, %v870, %v878
        %v886 = vsel %vm883, %v872, %v880
        %v887 = vsel %vm883, %v874, %v882
        %v888 = vsel %vm883, %v876, %v868
        %v889 = vsel %vm883, %v878, %v870
        %v890 = vsel %vm883, %v880, %v872
        %v891 = vsel %vm883, %v882, %v874
        %v892 = vadd.s32 %v223, 4294967288
        %v893 = vadd.s32 %v224, 4294967288
        %vm894 = vcmp.ge.s32.totalorder %v892, 0
        %vm895 = vcmp.ge.s32.totalorder %v893, 0
        %vm896 = vcmp.lt.s32.totalorder %v892, 256
        %vm897 = vcmp.lt.s32.totalorder %v893, 256
        %vm898 = vmand %vm894, %vm896
        %vm899 = vmand %vm895, %vm897
        %v900 = vsel %vm898, %v888, 0.0
        %v901 = vsel %vm899, %v884, 0.0
        %v902 = vsel %vm898, %v889, 0.0
        %v903 = vsel %vm899, %v885, 0.0
        %v904 = vsel %vm898, %v890, 0.0
        %v905 = vsel %vm899, %v886, 0.0
        %v906 = vsel %vm898, %v891, 0.0
        %v907 = vsel %vm899, %v887, 0.0
        %908 = vrot.lane.b32.xlu0 %v854, 120
        %v909 = vpop.permute.xlu0 %908
        %910 = vrot.lane.b32.xlu0 %v856, 120
        %v911 = vpop.permute.xlu0 %910
        %912 = vrot.lane.b32.xlu0 %v858, 120
        %v913 = vpop.permute.xlu0 %912
        %914 = vrot.lane.b32.xlu0 %v860, 120
        %v915 = vpop.permute.xlu0 %914
        %916 = vrot.lane.b32.xlu0 %v855, 120
        %v917 = vpop.permute.xlu0 %916
        %918 = vrot.lane.b32.xlu0 %v857, 120
        %v919 = vpop.permute.xlu0 %918
        %920 = vrot.lane.b32.xlu0 %v859, 120
        %v921 = vpop.permute.xlu0 %920
        %922 = vrot.lane.b32.xlu0 %v861, 120
        %v923 = vpop.permute.xlu0 %922
        %vm924 = vcmp.lt.s32.totalorder %v223, 120
        %v925 = vsel %vm924, %v909, %v917
        %v926 = vsel %vm924, %v911, %v919
        %v927 = vsel %vm924, %v913, %v921
        %v928 = vsel %vm924, %v915, %v923
        %v929 = vsel %vm924, %v917, %v909
        %v930 = vsel %vm924, %v919, %v911
        %v931 = vsel %vm924, %v921, %v913
        %v932 = vsel %vm924, %v923, %v915
        %v933 = vadd.s32 %v223, 8
        %v934 = vadd.s32 %v224, 8
        %vm935 = vcmp.ge.s32.totalorder %v933, 0
        %vm936 = vcmp.ge.s32.totalorder %v934, 0
        %vm937 = vcmp.lt.s32.totalorder %v933, 256
        %vm938 = vcmp.lt.s32.totalorder %v934, 256
        %vm939 = vmand %vm935, %vm937
        %vm940 = vmand %vm936, %vm938
        %v941 = vsel %vm939, %v925, 0.0
        %v942 = vsel %vm940, %v929, 0.0
        %v943 = vsel %vm939, %v926, 0.0
        %v944 = vsel %vm940, %v930, 0.0
        %v945 = vsel %vm939, %v927, 0.0
        %v946 = vsel %vm940, %v931, 0.0
        %v947 = vsel %vm939, %v928, 0.0
        %v948 = vsel %vm940, %v932, 0.0
        %v949 = vpack.c.bf16 %v902, %v900
        %v950 = vpack.c.bf16 %v903, %v901
        %v951 = vpack.c.bf16 %v906, %v904
        %v952 = vpack.c.bf16 %v907, %v905
        %v953 = vpack.c.bf16 %v856, %v854
        %v954 = vpack.c.bf16 %v857, %v855
        %v955 = vpack.c.bf16 %v860, %v858
        %v956 = vpack.c.bf16 %v861, %v859
        %v957 = vpack.c.bf16 %v943, %v941
        %v958 = vpack.c.bf16 %v944, %v942
        %v959 = vpack.c.bf16 %v947, %v945
        %v960 = vpack.c.bf16 %v948, %v946
        %961 = vset.pattern.permute.xlu0 3
        %962 = vperm.xlu0 %961, %v390
        %v963 = vpop.permute.xlu0 %962
        %965 = vset.pattern.permute.xlu0 3
        %966 = vperm.xlu0 %965, %v391
        %v967 = vpop.permute.xlu0 %966
        %969 = vset.pattern.permute.xlu0 3
        %970 = vperm.xlu0 %969, %v392
        %v971 = vpop.permute.xlu0 %970
        %973 = vset.pattern.permute.xlu0 3
        %974 = vperm.xlu0 %973, %v393
        %v975 = vpop.permute.xlu0 %974
        %v981 = vunpack.c.l.b16 %v863
        %v982 = vunpack.c.l.b16 %v864
        %v983 = vunpack.c.l.b16 %v865
        %v984 = vunpack.c.l.b16 %v866
        %v985 = vpack.c.b16 %v982, %v981
        %v986 = vpack.c.b16 %v984, %v983
        %v988 = vsel %vm570, %v985, 0
        %v991 = vsel %vm570, %v986, 0
        %993 = vmatprep.subr.bf16.mxu0 %v950
        %994 = vmatpush1.bf16.msra.mxu0 %v949
        %995 = vmatprep.subr.bf16.mxu0 %v952
        %996 = vmatpush1.bf16.msra.mxu0 %v951
        %997 = vmatprep.subr.bf16.mxu0 %v954
        %998 = vmatpush1.bf16.msra.mxu0 %v953
        %999 = vmatprep.subr.bf16.mxu0 %v956
        %1000 = vmatpush1.bf16.msra.mxu0 %v955
        %1001 = vmatprep.subr.bf16.mxu0 %v958
        %1002 = vmatpush1.bf16.msra.mxu0 %v957
        %1003 = vmatprep.subr.bf16.mxu0 %v960
        %1004 = vmatpush1.bf16.msra.mxu0 %v959
        %1005 = vmatprep.subr.bf16.mxu0 0
        %1006 = vmatpush1.bf16.msra.mxu0 0
        %1007 = vmatprep.subr.bf16.mxu0 0
        %1008 = vmatpush1.bf16.msra.mxu0 0
        %1009 = vmatprep.subr.bf16.mxu0 0
        %1010 = vmatpush1.bf16.msra.mxu0 0
        %1011 = vmatprep.subr.bf16.mxu0 0
        %1012 = vmatpush1.bf16.msra.mxu0 0
        %1013 = vmatprep.subr.bf16.mxu0 0
        %1014 = vmatpush1.bf16.msra.mxu0 0
        %1015 = vmatprep.subr.bf16.mxu0 0
        %1016 = vmatpush1.bf16.msra.mxu0 0
        %1017 = vmatprep.subr.bf16.mxu0 0
        %1018 = vmatpush1.bf16.msra.mxu0 0
        %1019 = vmatprep.subr.bf16.mxu0 0
        %1020 = vmatpush1.bf16.msra.mxu0 0
        %1021 = vmatprep.subr.bf16.mxu0 0
        %1022 = vmatpush1.bf16.msra.mxu0 0
        %1023 = vmatprep.subr.bf16.mxu0 0
        %1024 = vmatpush1.bf16.msra.mxu0 0
        %1025 = vmatprep.mubr.bf16.mxu0 0
        %1026 = vmatmul.mubr.bf16.gmra.mrb[0].mxu0 %v988
        %v1027 = vpop.f32.mrb[0].mxu0
        %v1028 = vadd.f32 %v963, %v1027
        %v1029 = vpop.f32.mrb[0].mxu0
        %v1030 = vadd.f32 %v963, %v1029
        %v1031 = vpop.f32.mrb[0].mxu0
        %v1032 = vadd.f32 %v967, %v1031
        %v1033 = vpop.f32.mrb[0].mxu0
        %v1034 = vadd.f32 %v967, %v1033
        %1035 = vmatprep.mubr.bf16.mxu0 0
        %1036 = vmatmul.mubr.bf16.gmra.mrb[0].mxu0 %v991
        %v1037 = vpop.f32.mrb[0].mxu0
        %v1038 = vadd.f32 %v971, %v1037
        %v1039 = vpop.f32.mrb[0].mxu0
        %v1040 = vadd.f32 %v971, %v1039
        %v1041 = vpop.f32.mrb[0].mxu0
        %v1042 = vadd.f32 %v975, %v1041
        %v1043 = vpop.f32.mrb[0].mxu0
        %v1044 = vadd.f32 %v975, %v1043
        %1045 = vdwg.mxu0
        %vm1046 = vcmp.ge.f32.partialorder %v1028, 0.0
        %vm1047 = vcmp.ge.f32.partialorder %v1030, 0.0
        %vm1048 = vcmp.ge.f32.partialorder %v1032, 0.0
        %vm1049 = vcmp.ge.f32.partialorder %v1034, 0.0
        %vm1050 = vcmp.ge.f32.partialorder %v1038, 0.0
        %vm1051 = vcmp.ge.f32.partialorder %v1040, 0.0
        %vm1052 = vcmp.ge.f32.partialorder %v1042, 0.0
        %vm1053 = vcmp.ge.f32.partialorder %v1044, 0.0
        %v1054 = vmul.f32 %v1028, 0.2
        %v1055 = vmul.f32 %v1030, 0.2
        %v1056 = vmul.f32 %v1032, 0.2
        %v1057 = vmul.f32 %v1034, 0.2
        %v1058 = vmul.f32 %v1038, 0.2
        %v1059 = vmul.f32 %v1040, 0.2
        %v1060 = vmul.f32 %v1042, 0.2
        %v1061 = vmul.f32 %v1044, 0.2
        %v1062 = vsel %vm1046, %v1028, %v1054
        %v1063 = vsel %vm1047, %v1030, %v1055
        %v1064 = vsel %vm1048, %v1032, %v1056
        %v1065 = vsel %vm1049, %v1034, %v1057
        %v1066 = vsel %vm1050, %v1038, %v1058
        %v1067 = vsel %vm1051, %v1040, %v1059
        %v1068 = vsel %vm1052, %v1042, %v1060
        %v1069 = vsel %vm1053, %v1044, %v1061
        %v1070 = vld [vmem:[%s3] sm:$0x1]
        %1071 = vrot.lane.b32.xlu0 %v1062, 1
        %v1072 = vpop.permute.xlu0 %1071
        %1073 = vrot.lane.b32.xlu0 %v1064, 1
        %v1074 = vpop.permute.xlu0 %1073
        %1075 = vrot.lane.b32.xlu0 %v1066, 1
        %v1076 = vpop.permute.xlu0 %1075
        %1077 = vrot.lane.b32.xlu0 %v1068, 1
        %v1078 = vpop.permute.xlu0 %1077
        %1079 = vrot.lane.b32.xlu0 %v1063, 1
        %v1080 = vpop.permute.xlu0 %1079
        %1081 = vrot.lane.b32.xlu0 %v1065, 1
        %v1082 = vpop.permute.xlu0 %1081
        %1083 = vrot.lane.b32.xlu0 %v1067, 1
        %v1084 = vpop.permute.xlu0 %1083
        %1085 = vrot.lane.b32.xlu0 %v1069, 1
        %v1086 = vpop.permute.xlu0 %1085
        %v1087 = vsel %vm240, %v1072, %v1080
        %v1088 = vsel %vm240, %v1074, %v1082
        %v1089 = vsel %vm240, %v1076, %v1084
        %v1090 = vsel %vm240, %v1078, %v1086
        %v1091 = vsel %vm240, %v1080, %v1072
        %v1092 = vsel %vm240, %v1082, %v1074
        %v1093 = vsel %vm240, %v1084, %v1076
        %v1094 = vsel %vm240, %v1086, %v1078
        %v1095 = vsel %vm249, %v1091, 0.0
        %v1096 = vsel %vm250, %v1087, 0.0
        %v1097 = vsel %vm249, %v1092, 0.0
        %v1098 = vsel %vm250, %v1088, 0.0
        %v1099 = vsel %vm249, %v1093, 0.0
        %v1100 = vsel %vm250, %v1089, 0.0
        %v1101 = vsel %vm249, %v1094, 0.0
        %v1102 = vsel %vm250, %v1090, 0.0
        %1103 = vrot.lane.b32.xlu0 %v1062, 127
        %v1104 = vpop.permute.xlu0 %1103
        %1105 = vrot.lane.b32.xlu0 %v1064, 127
        %v1106 = vpop.permute.xlu0 %1105
        %1107 = vrot.lane.b32.xlu0 %v1066, 127
        %v1108 = vpop.permute.xlu0 %1107
        %1109 = vrot.lane.b32.xlu0 %v1068, 127
        %v1110 = vpop.permute.xlu0 %1109
        %1111 = vrot.lane.b32.xlu0 %v1063, 127
        %v1112 = vpop.permute.xlu0 %1111
        %1113 = vrot.lane.b32.xlu0 %v1065, 127
        %v1114 = vpop.permute.xlu0 %1113
        %1115 = vrot.lane.b32.xlu0 %v1067, 127
        %v1116 = vpop.permute.xlu0 %1115
        %1117 = vrot.lane.b32.xlu0 %v1069, 127
        %v1118 = vpop.permute.xlu0 %1117
        %v1119 = vsel %vm257, %v1104, %v1112
        %v1120 = vsel %vm257, %v1106, %v1114
        %v1121 = vsel %vm257, %v1108, %v1116
        %v1122 = vsel %vm257, %v1110, %v1118
        %v1123 = vsel %vm257, %v1112, %v1104
        %v1124 = vsel %vm257, %v1114, %v1106
        %v1125 = vsel %vm257, %v1116, %v1108
        %v1126 = vsel %vm257, %v1118, %v1110
        %v1127 = vsel %vm266, %v1119, 0.0
        %v1128 = vsel %vm267, %v1123, 0.0
        %v1129 = vsel %vm266, %v1120, 0.0
        %v1130 = vsel %vm267, %v1124, 0.0
        %v1131 = vsel %vm266, %v1121, 0.0
        %v1132 = vsel %vm267, %v1125, 0.0
        %v1133 = vsel %vm266, %v1122, 0.0
        %v1134 = vsel %vm267, %v1126, 0.0
        %v1135 = vpack.c.bf16 %v1097, %v1095
        %v1136 = vpack.c.bf16 %v1098, %v1096
        %v1137 = vpack.c.bf16 %v1101, %v1099
        %v1138 = vpack.c.bf16 %v1102, %v1100
        %v1139 = vpack.c.bf16 %v1064, %v1062
        %v1140 = vpack.c.bf16 %v1065, %v1063
        %v1141 = vpack.c.bf16 %v1068, %v1066
        %v1142 = vpack.c.bf16 %v1069, %v1067
        %v1143 = vpack.c.bf16 %v1129, %v1127
        %v1144 = vpack.c.bf16 %v1130, %v1128
        %v1145 = vpack.c.bf16 %v1133, %v1131
        %v1146 = vpack.c.bf16 %v1134, %v1132
        %v1147 = vld [vmem:[%s4] sm:$0x1]
        %1149 = vset.pattern.permute.xlu0 4
        %1150 = vperm.xlu0 %1149, %v1147
        %v1151 = vpop.permute.xlu0 %1150
        %v1154 = vsel %vm570, %v1070, 0
        %1156 = vmatprep.subr.bf16.mxu0 %v1136
        %1157 = vmatpush1.bf16.msra.mxu0 %v1135
        %1158 = vmatprep.subr.bf16.mxu0 %v1138
        %1159 = vmatpush1.bf16.msra.mxu0 %v1137
        %1160 = vmatprep.subr.bf16.mxu0 %v1140
        %1161 = vmatpush1.bf16.msra.mxu0 %v1139
        %1162 = vmatprep.subr.bf16.mxu0 %v1142
        %1163 = vmatpush1.bf16.msra.mxu0 %v1141
        %1164 = vmatprep.subr.bf16.mxu0 %v1144
        %1165 = vmatpush1.bf16.msra.mxu0 %v1143
        %1166 = vmatprep.subr.bf16.mxu0 %v1146
        %1167 = vmatpush1.bf16.msra.mxu0 %v1145
        %1168 = vmatprep.subr.bf16.mxu0 0
        %1169 = vmatpush1.bf16.msra.mxu0 0
        %1170 = vmatprep.subr.bf16.mxu0 0
        %1171 = vmatpush1.bf16.msra.mxu0 0
        %1172 = vmatprep.subr.bf16.mxu0 0
        %1173 = vmatpush1.bf16.msra.mxu0 0
        %1174 = vmatprep.subr.bf16.mxu0 0
        %1175 = vmatpush1.bf16.msra.mxu0 0
        %1176 = vmatprep.subr.bf16.mxu0 0
        %1177 = vmatpush1.bf16.msra.mxu0 0
        %1178 = vmatprep.subr.bf16.mxu0 0
        %1179 = vmatpush1.bf16.msra.mxu0 0
        %1180 = vmatprep.subr.bf16.mxu0 0
        %1181 = vmatpush1.bf16.msra.mxu0 0
        %1182 = vmatprep.subr.bf16.mxu0 0
        %1183 = vmatpush1.bf16.msra.mxu0 0
        %1184 = vmatprep.subr.bf16.mxu0 0
        %1185 = vmatpush1.bf16.msra.mxu0 0
        %1186 = vmatprep.subr.bf16.mxu0 0
        %1187 = vmatpush1.bf16.msra.mxu0 0
        %1188 = vmatprep.mubr.bf16.mxu0 0
        %1189 = vmatmul.mubr.bf16.gmra.mrb[0].mxu0 %v1154
        %v1190 = vpop.f32.mrb[0].mxu0
        %v1191 = vadd.f32 %v1151, %v1190
        %v1192 = vpop.f32.mrb[0].mxu0
        %v1193 = vadd.f32 %v1151, %v1192
        %v1194 = vpop.f32.mrb[0].mxu0
        %v1195 = vpop.f32.mrb[0].mxu0
        %1196 = vdwg.mxu0
        %v1199 = vcombine.low %v1191, %v1193
        %v1201 = vunpack.c.l.s4 1966171168
        %v1202 = vunpack.c.0.s8 %v1201
        %v1203 = vlaneseq
        %v1204 = vshrl.u32 %v1203, 7
        %v1205 = vsub.s32 %v1202, %v1204
        %v1206 = vrot.slane %v1199, %v1205
        %v1208 = vunpack.c.l.s4 1966171168
        %v1209 = vunpack.c.0.s8 %v1208
        %v1210 = vlaneseq
        %v1211 = vshrl.u32 %v1210, 7
        %v1212 = vsub.s32 %v1209, %v1211
        %v1213 = vrot.slane %v1206, %v1212
        %v1215 = vlaneseq
        %vm1216 = vcmp.ge.s32.totalorder %v1215, 0
        %vm1217 = vcmp.lt.s32.totalorder %v1215, 256
        %vm1218 = vmand %vm1216, %vm1217
        %1219 = vst.msk [vmem:[%s215] sm:$0x3] %vm1218, %v1213
        %s1220 = sand.u32 %s137, 1
        %s1221 = scalar_lea.sflag [#allocation3], %s1220
        %s1222 = sand.u32 %s137, 1
        %s1223 = smul.addr %s1222, 2
        %s1224 = scalar_lea.vmem [#allocation2], %s1223
        // Predicated region
        $region41: #{tpu_custom_call.1} parent=39 // pred_check
          %p1225 = pneg %p147
        $region42: #{tpu_custom_call.1} parent=39 // pred_check_branch
          %1227 = sbr.rel (%p1225) target = $region44
        $region43: #{tpu_custom_call.1} parent=39 // pred_region
          %s1229 = ssub.s32 32, 32
          %1230 = vsyncadd %s1221, %s1229
          %s1231 = smul.addr %s19, 2
          %s1232 = smul.addr %s1231, 16
          %s1233 = scalar_lea.hbm %s5, %s1232
          %s1235 = sshll.u32 %s1224, 4
          %s1236 = int_to_ptr.vmem [resolvable:$true] %s1235
          %1238 = dma.vmem_to_hbm [thread:$0]  %s1236, 32, %s1233, %s1221
        $region44: #{tpu_custom_call.1} parent=39 // pred_fallthru
          _
      $region40: #{tpu_custom_call.1} parent=5 // pred_fallthru
        _
      %p1239 = scmp.le.s32.totalorder 2, %s14
      // Predicated region
      $region45: #{tpu_custom_call.1} parent=5 // pred_check
        %p1240 = pneg %p1239
      $region46: #{tpu_custom_call.1} parent=5 // pred_check_branch
        %1242 = sbr.rel (%p1240) target = $region48
      $region47: #{tpu_custom_call.1} parent=5 // pred_region
        %s1243 = ssub.s32 %s14, 2
        // Predicated region
        $region49: #{tpu_custom_call.1} parent=47 // pred_check
          %p1244 = pneg %p153
        $region50: #{tpu_custom_call.1} parent=47 // pred_check_branch
          %1246 = sbr.rel (%p1244) target = $region52
        $region51: #{tpu_custom_call.1} parent=47 // pred_region
          %s1247 = sand.u32 %s138, 1
          %s1248 = scalar_lea.sflag [#allocation3], %s1247
          %s1249 = sand.u32 %s138, 1
          %s1250 = smul.addr %s1249, 2
          %s1251 = scalar_lea.vmem [#allocation2], %s1250
          %1252 = dma.done %s1248, 32
        $region52: #{tpu_custom_call.1} parent=47 // pred_fallthru
          _
      $region48: #{tpu_custom_call.1} parent=5 // pred_fallthru
        _
    $region6: #{tpu_custom_call.1} parent=1 // loop_footer
      %s18 = sadd.s32 1, %s14
    $region7: #{tpu_custom_call.1} parent=1 // loop_footer_branch
      %13 = sbr.rel target = $region3
    $region8: #{tpu_custom_call.1} parent=1 // loop_exit
      _
    %1253 = vsyncpa [#allocation3], 1
    %s1254 = scalar_lea.sflag [#allocation3], 1
    %1255 = vsyncpa %s1254, 1

</llo_original>
